<compile_context>
chip_gen: v6e
topology: v6e:2x2x1
jax: 0.10.0
libtpu: 0.0.40
codegen_flags: <defaults>
</compile_context>

<pallas_src>
import functools

import jax
import jax.numpy as jnp
from jax.experimental import pallas as pl
from jax.experimental.pallas import tpu as pltpu


# ---------------------------------------------------------------------------
# Kernel
# ---------------------------------------------------------------------------
def _sigmoid(x):
    # sigmoid(x) = 0.5*(tanh(0.5x)+1): a single EUP op instead of exp+divide.
    return 0.5 * jnp.tanh(0.5 * x) + 0.5


def _lstm_decoder_kernel(xg_ref, whh_ref, wfc_ref, bfc_ref, out_ref,
                         h_ref, c_ref):
    """One (batch block, time tile) step of the LSTM decoder.

    xg_ref  : (bb, 4Hp)           f32   hoisted z @ W_ih^T + (b_ih + b_hh)
    whh_ref : (Hp, 4Hp)           bf16  W_hh^T  (gate order i, f, g, o)
    wfc_ref : (Hp, O_pad)         bf16  W_fc^T
    bfc_ref : (1, O_pad)          f32
    out_ref : (bb, t_tile*O_pad)  f32   lane-dense output slab
    scratch:
      h_ref (bb, Hp) f32  recurrent h carry across time tiles
      c_ref (bb, Hp) f32  recurrent c carry across time tiles
    """
    Hp = whh_ref.shape[0]
    O_pad = wfc_ref.shape[1]
    bb = out_ref.shape[0]
    t_tile = out_ref.shape[1] // O_pad

    # First time tile of each batch block: reset the recurrent state.
    @pl.when(pl.program_id(1) == 0)
    def _init():
        h_ref[...] = jnp.zeros_like(h_ref)
        c_ref[...] = jnp.zeros_like(c_ref)

    x_gates = xg_ref[...]                       # (bb, 4Hp) f32, biases folded
    whh = whh_ref[...]                          # (Hp, 4Hp) bf16, VMEM resident
    wfc = wfc_ref[...]                          # (Hp, O_pad) bf16
    bfc = jnp.broadcast_to(bfc_ref[...], (bb, O_pad))   # hoisted broadcast

    h = h_ref[...]                              # f32 carry
    c = c_ref[...]                              # f32 carry
    h_bf = h.astype(jnp.bfloat16)               # bf16 only at the MXU input

    # Fully unrolled recurrence over this time tile (t_tile <= 32): static
    # slice indices + cross-iteration scheduler visibility.  The per-step FC
    # matmul has no consumer inside the step, so it overlaps the next step's
    # recurrent matmul.
    for t in range(t_tile):
        gates = x_gates + jnp.dot(h_bf, whh, preferred_element_type=jnp.float32)
        i_g = _sigmoid(gates[:, 0 * Hp:1 * Hp])
        f_g = _sigmoid(gates[:, 1 * Hp:2 * Hp])
        g_g = jnp.tanh(gates[:, 2 * Hp:3 * Hp])
        o_g = _sigmoid(gates[:, 3 * Hp:4 * Hp])
        c = f_g * c + i_g * g_g                 # state math stays f32
        h = o_g * jnp.tanh(c)
        h_bf = h.astype(jnp.bfloat16)
        y_t = jnp.dot(h_bf, wfc, preferred_element_type=jnp.float32) + bfc
        out_ref[:, t * O_pad:(t + 1) * O_pad] = y_t

    h_ref[...] = h
    c_ref[...] = c


# ---------------------------------------------------------------------------
# Wrapper
# ---------------------------------------------------------------------------
def _round_up(x, m):
    return ((x + m - 1) // m) * m


def prepare_decoder_params(params):
    """One-time weight prep: per-gate padding of H to a multiple of 128, O to a
    multiple of 16, transpose, bf16 cast, bias fold.  Padding is numerically
    inert (padded h lanes stay exactly 0 and are filtered by zero weights)."""
    w_ih = jnp.asarray(params["w_ih"], jnp.float32)   # (4H, H)
    w_hh = jnp.asarray(params["w_hh"], jnp.float32)   # (4H, H)
    b_ih = jnp.asarray(params["b_ih"], jnp.float32)   # (4H,)
    b_hh = jnp.asarray(params["b_hh"], jnp.float32)   # (4H,)
    w_fc = jnp.asarray(params["w_fc"], jnp.float32)   # (O, H)
    b_fc = jnp.asarray(params["b_fc"], jnp.float32)   # (O,)
    H = w_hh.shape[1]
    O = w_fc.shape[0]
    Hp = _round_up(H, 128)
    O_pad = _round_up(O, 16)          # t_tile (mult of 8) * O_pad is mult of 128

    def pad_gate_mat(w):              # (4H, H) -> (4Hp, Hp), per-gate blocks
        w4 = w.reshape(4, H, H)
        w4 = jnp.pad(w4, ((0, 0), (0, Hp - H), (0, Hp - H)))
        return w4.reshape(4 * Hp, Hp)

    def pad_gate_vec(b):              # (4H,) -> (4Hp,)
        b4 = jnp.pad(b.reshape(4, H), ((0, 0), (0, Hp - H)))
        return b4.reshape(4 * Hp)

    w_fc_p = jnp.pad(w_fc, ((0, O_pad - O), (0, Hp - H)))
    b_fc_p = jnp.pad(b_fc, (0, O_pad - O))
    return {
        "w_ih_t": pad_gate_mat(w_ih).T.astype(jnp.bfloat16),          # (Hp, 4Hp)
        "w_hh_t": pad_gate_mat(w_hh).T.astype(jnp.bfloat16),          # (Hp, 4Hp)
        "bias": pad_gate_vec(b_ih + b_hh).reshape(1, 4 * Hp),         # (1, 4Hp)
        "w_fc_t": w_fc_p.T.astype(jnp.bfloat16),                      # (Hp, O_pad)
        "b_fc": b_fc_p.reshape(1, O_pad),                             # (1, O_pad)
    }


@functools.partial(jax.jit, static_argnums=(1, 2))
def bilstm_decoder_forward(z, seq_len, output_dim, prepared):
    """Pallas equivalent of BiLSTMDecoder.forward(z, seq_len).

    Returns recon_x of shape (B, seq_len, output_dim), float32, batch-first."""
    B, H = z.shape
    Hp = prepared["w_hh_t"].shape[0]
    O_pad = prepared["w_fc_t"].shape[1]

    # --- batch blocking: near-equal 16-aligned blocks; >=2 blocks when B >= 32
    #     so the "parallel" batch axis can feed both TensorCores (v7x megacore).
    num_b_blocks = max(1, -(-B // 256))
    if B >= 32:
        num_b_blocks = max(num_b_blocks, 2)
    block_b = _round_up(-(-B // num_b_blocks), 16)
    num_b_blocks = -(-B // block_b)
    B_pad = num_b_blocks * block_b

    # --- time tiling: largest of (32, 16, 8) dividing round_up(seq_len, 8).
    seq8 = _round_up(seq_len, 8)
    t_tile = 8
    for cand in (32, 16):
        if seq8 % cand == 0:
            t_tile = cand
            break

    # --- VMEM budget (v7x has only 64 MiB/TC): shrink tiles until we fit.
    def vmem_est(bb, tt):
        return (2 * Hp * 4 * Hp * 2            # W_hh^T (x2 pipeline bufs, bf16)
                + 2 * Hp * O_pad * 2           # W_fc^T
                + 2 * 8 * 128 * 4              # b_fc tile (padded), negligible
                + 2 * bb * 4 * Hp * 4          # x_gates input blocks (f32)
                + 2 * bb * tt * O_pad * 4      # output blocks (f32)
                + 2 * bb * Hp * 4)             # h / c carries
    budget = 40 * 1024 * 1024
    while vmem_est(block_b, t_tile) > budget and t_tile > 8:
        t_tile //= 2
    while vmem_est(block_b, t_tile) > budget and block_b > 16:
        block_b = _round_up(block_b // 2, 16)
        num_b_blocks = -(-B // block_b)
        B_pad = num_b_blocks * block_b

    seq_pad = _round_up(seq_len, t_tile)
    grid = (num_b_blocks, seq_pad // t_tile)

    # --- hoisted time-invariant input-gate term (one XLA matmul per forward);
    #     both LSTM biases folded in.  Padded batch rows / gate columns are 0.
    z_pad = jnp.pad(z.astype(jnp.float32), ((0, B_pad - B), (0, Hp - H)))
    xg = jnp.dot(z_pad.astype(jnp.bfloat16), prepared["w_ih_t"],
                 preferred_element_type=jnp.float32) + prepared["bias"]

    vmem_limit = int(min(max(vmem_est(block_b, t_tile) + (8 << 20), 32 << 20),
                         64 << 20))

    out = pl.pallas_call(
        _lstm_decoder_kernel,
        out_shape=jax.ShapeDtypeStruct((B_pad, seq_pad * O_pad), jnp.float32),
        grid_spec=pltpu.PrefetchScalarGridSpec(
            num_scalar_prefetch=0,
            grid=grid,
            in_specs=[
                pl.BlockSpec((block_b, 4 * Hp), lambda b, t: (b, 0)),   # x_gates
                pl.BlockSpec((Hp, 4 * Hp), lambda b, t: (0, 0)),        # W_hh^T
                pl.BlockSpec((Hp, O_pad), lambda b, t: (0, 0)),         # W_fc^T
                pl.BlockSpec((1, O_pad), lambda b, t: (0, 0)),          # b_fc
            ],
            out_specs=pl.BlockSpec((block_b, t_tile * O_pad),
                                   lambda b, t: (b, t)),
            scratch_shapes=[
                pltpu.VMEM((block_b, Hp), jnp.float32),                 # h carry
                pltpu.VMEM((block_b, Hp), jnp.float32),                 # c carry
            ],
        ),
        compiler_params=pltpu.CompilerParams(
            dimension_semantics=("parallel", "arbitrary"),
            vmem_limit_bytes=vmem_limit),
    )(xg, prepared["w_hh_t"], prepared["w_fc_t"], prepared["b_fc"])

    out = out.reshape(B_pad, seq_pad, O_pad)[:B, :seq_len, :output_dim]
    return out


# ---------------------------------------------------------------------------
# References (plain JAX) and test
# ---------------------------------------------------------------------------
def _reference_forward_f32(z, seq_len, params):
    """Exact module semantics (all f32): nn.LSTM(batch_first) + nn.Linear."""
    w_ih, w_hh, b_ih, b_hh, w_fc, b_fc = (
        params["w_ih"], params["w_hh"], params["b_ih"],
        params["b_hh"], params["w_fc"], params["b_fc"],
    )
    B, H = z.shape
    h = jnp.zeros((B, H), jnp.float32)
    c = jnp.zeros((B, H), jnp.float32)
    outs = []
    for _ in range(seq_len):
        gates = z @ w_ih.T + b_ih + h @ w_hh.T + b_hh
        i_g = jax.nn.sigmoid(gates[:, 0 * H:1 * H])
        f_g = jax.nn.sigmoid(gates[:, 1 * H:2 * H])
        g_g = jnp.tanh(gates[:, 2 * H:3 * H])
        o_g = jax.nn.sigmoid(gates[:, 3 * H:4 * H])
        c = f_g * c + i_g * g_g
        h = o_g * jnp.tanh(c)
        outs.append(h @ w_fc.T + b_fc)
    return jnp.stack(outs, axis=1)


def _reference_forward_bf16(z, seq_len, params):
    """Same math as the kernel: bf16 matmul operands, f32 accumulation/state."""
    B, H = z.shape
    w_ih = params["w_ih"].astype(jnp.bfloat16)
    w_hh = params["w_hh"].astype(jnp.bfloat16)
    w_fc = params["w_fc"].astype(jnp.bfloat16)
    bias = (params["b_ih"] + params["b_hh"]).astype(jnp.float32)
    b_fc = params["b_fc"].astype(jnp.float32)
    x_gates = jnp.dot(z.astype(jnp.bfloat16), w_ih.T,
                      preferred_element_type=jnp.float32) + bias
    h = jnp.zeros((B, H), jnp.float32)
    c = jnp.zeros((B, H), jnp.float32)
    outs = []
    for _ in range(seq_len):
        gates = x_gates + jnp.dot(h.astype(jnp.bfloat16), w_hh.T,
                                  preferred_element_type=jnp.float32)
        i_g = jax.nn.sigmoid(gates[:, 0 * H:1 * H])
        f_g = jax.nn.sigmoid(gates[:, 1 * H:2 * H])
        g_g = jnp.tanh(gates[:, 2 * H:3 * H])
        o_g = jax.nn.sigmoid(gates[:, 3 * H:4 * H])
        c = f_g * c + i_g * g_g
        h = o_g * jnp.tanh(c)
        outs.append(jnp.dot(h.astype(jnp.bfloat16), w_fc.T,
                            preferred_element_type=jnp.float32) + b_fc)
    return jnp.stack(outs, axis=1)


def init_params(key, hidden_dim, output_dim):
    """Deterministic init mirroring PyTorch shapes: uniform(-1/sqrt(H), 1/sqrt(H))."""
    ks = jax.random.split(key, 6)
    bound = 1.0 / jnp.sqrt(jnp.float32(hidden_dim))
    u = lambda k, shape: jax.random.uniform(
        k, shape, jnp.float32, minval=-bound, maxval=bound)
    return {
        "w_ih": u(ks[0], (4 * hidden_dim, hidden_dim)),
        "w_hh": u(ks[1], (4 * hidden_dim, hidden_dim)),
        "b_ih": u(ks[2], (4 * hidden_dim,)),
        "b_hh": u(ks[3], (4 * hidden_dim,)),
        "w_fc": u(ks[4], (output_dim, hidden_dim)),
        "b_fc": u(ks[5], (output_dim,)),
    }


if __name__ == "__main__":
    batch = 2
    hidden_dim = 32
    output_dim = 16
    seq_len = 8

    key = jax.random.PRNGKey(0)
    k_z, k_p = jax.random.split(key)
    z = jax.random.normal(k_z, (batch, hidden_dim), jnp.float32)
    params = init_params(k_p, hidden_dim, output_dim)
    prepared = prepare_decoder_params(params)

    recon = bilstm_decoder_forward(z, seq_len, output_dim, prepared)
    recon = jax.block_until_ready(recon)
    assert recon.shape == (batch, seq_len, output_dim), recon.shape

    # Tight check against a reference doing the same bf16-operand / f32-state math.
    ref_bf16 = _reference_forward_bf16(z, seq_len, params)
    err_bf16 = float(jnp.max(jnp.abs(recon - ref_bf16)))
    assert err_bf16 < 2e-2, err_bf16

    # Loose sanity check against the exact f32 module semantics.
    ref_f32 = _reference_forward_f32(z, seq_len, params)
    err_f32 = float(jnp.max(jnp.abs(recon - ref_f32)))
    assert err_f32 < 1e-1, err_f32

    print("KERNEL_OK")
</pallas_src>

<mosaic_0001>
module attributes {stable_mosaic.version = 11 : i64} {
  func.func @_lstm_decoder_kernel(%arg0: i32, %arg1: i32, %arg2: memref<16x512xf32, #tpu.memory_space<vmem>>, %arg3: memref<128x512xbf16, #tpu.memory_space<vmem>>, %arg4: memref<128x16xbf16, #tpu.memory_space<vmem>>, %arg5: memref<1x16xf32, #tpu.memory_space<vmem>>, %arg6: memref<16x128xf32, #tpu.memory_space<vmem>>, %arg7: memref<16x128xf32, #tpu.memory_space<vmem>>, %arg8: memref<16x128xf32, #tpu.memory_space<vmem>>) attributes {dimension_semantics = [#tpu.dimension_semantics<parallel>, #tpu.dimension_semantics<arbitrary>], iteration_bounds = array<i64: 1, 1>, scalar_prefetch = 0 : i64, scratch_operands = 2 : i64, tpu.core_type = #tpu.core_type<tc>, window_params = [{transform_indices = @transform_0, window_bounds = array<i64: 16, 512>}, {pipeline_mode = #tpu.pipeline_mode<synchronous>, transform_indices = @transform_1, window_bounds = array<i64: 128, 512>}, {pipeline_mode = #tpu.pipeline_mode<synchronous>, transform_indices = @transform_2, window_bounds = array<i64: 128, 16>}, {pipeline_mode = #tpu.pipeline_mode<synchronous>, transform_indices = @transform_3, window_bounds = array<i64: 1, 16>}, {transform_indices = @transform_4, window_bounds = array<i64: 16, 128>}]} {
    %c0_i32 = arith.constant 0 : i32
    %0 = arith.cmpi eq, %arg1, %c0_i32 : i32
    %1 = arith.extui %0 : i1 to i32
    %c0_i32_0 = arith.constant 0 : i32
    %2 = arith.cmpi ne, %1, %c0_i32_0 : i32
    scf.if %2 {
      %cst_112 = arith.constant 0.000000e+00 : f32
      %310 = vector.broadcast %cst_112 : f32 to vector<16x128xf32>
      %c0_113 = arith.constant 0 : index
      %c0_114 = arith.constant 0 : index
      %311 = vector.load %arg7[%c0_113, %c0_114] : memref<16x128xf32, #tpu.memory_space<vmem>>, vector<16x128xf32>
      tpu.vector_store %arg7[%c0_113, %c0_114], %310 {strides = array<i32>} : memref<16x128xf32, #tpu.memory_space<vmem>>, vector<16x128xf32>,
      %cst_115 = arith.constant 0.000000e+00 : f32
      %312 = vector.broadcast %cst_115 : f32 to vector<16x128xf32>
      %c0_116 = arith.constant 0 : index
      %c0_117 = arith.constant 0 : index
      %313 = vector.load %arg8[%c0_116, %c0_117] : memref<16x128xf32, #tpu.memory_space<vmem>>, vector<16x128xf32>
      tpu.vector_store %arg8[%c0_116, %c0_117], %312 {strides = array<i32>} : memref<16x128xf32, #tpu.memory_space<vmem>>, vector<16x128xf32>,
    } else {
    }
    %c0 = arith.constant 0 : index
    %c0_1 = arith.constant 0 : index
    %3 = vector.load %arg2[%c0, %c0_1] : memref<16x512xf32, #tpu.memory_space<vmem>>, vector<16x512xf32>
    %c0_2 = arith.constant 0 : index
    %c0_3 = arith.constant 0 : index
    %4 = vector.load %arg3[%c0_2, %c0_3] : memref<128x512xbf16, #tpu.memory_space<vmem>>, vector<128x512xbf16>
    %c0_4 = arith.constant 0 : index
    %c0_5 = arith.constant 0 : index
    %5 = vector.load %arg4[%c0_4, %c0_5] : memref<128x16xbf16, #tpu.memory_space<vmem>>, vector<128x16xbf16>
    %c0_6 = arith.constant 0 : index
    %c0_7 = arith.constant 0 : index
    %6 = vector.load %arg5[%c0_6, %c0_7] : memref<1x16xf32, #tpu.memory_space<vmem>>, vector<1x16xf32>
    %7 = vector.shape_cast %6 : vector<1x16xf32> to vector<1x16xf32>
    %8 = vector.broadcast %7 : vector<1x16xf32> to vector<16x16xf32>
    %c0_8 = arith.constant 0 : index
    %c0_9 = arith.constant 0 : index
    %9 = vector.load %arg7[%c0_8, %c0_9] : memref<16x128xf32, #tpu.memory_space<vmem>>, vector<16x128xf32>
    %c0_10 = arith.constant 0 : index
    %c0_11 = arith.constant 0 : index
    %10 = vector.load %arg8[%c0_10, %c0_11] : memref<16x128xf32, #tpu.memory_space<vmem>>, vector<16x128xf32>
    %11 = arith.truncf %9 : vector<16x128xf32> to vector<16x128xbf16>
    %cst = arith.constant dense<0.000000e+00> : vector<16x512xf32>
    %12 = tpu.matmul %11, %4, %cst {dimension_numbers = #tpu.dot_dimension_numbers<[1], [0], [0], [1], [0, 0, 1, 1], [], []>} : vector<16x128xbf16>, vector<128x512xbf16>, vector<16x512xf32> -> vector<16x512xf32>
    %13 = arith.addf %3, %12 : vector<16x512xf32>
    %14 = vector.extract_strided_slice %13 {offsets = [0, 0], sizes = [16, 128], strides = [1, 1]} : vector<16x512xf32> to vector<16x128xf32>
    %cst_12 = arith.constant 5.000000e-01 : f32
    %15 = vector.broadcast %cst_12 : f32 to vector<16x128xf32>
    %16 = arith.mulf %15, %14 : vector<16x128xf32>
    %17 = math.tanh %16 : vector<16x128xf32>
    %cst_13 = arith.constant 5.000000e-01 : f32
    %18 = vector.broadcast %cst_13 : f32 to vector<16x128xf32>
    %19 = arith.mulf %18, %17 : vector<16x128xf32>
    %cst_14 = arith.constant 5.000000e-01 : f32
    %20 = vector.broadcast %cst_14 : f32 to vector<16x128xf32>
    %21 = arith.addf %19, %20 : vector<16x128xf32>
    %22 = vector.extract_strided_slice %13 {offsets = [0, 128], sizes = [16, 128], strides = [1, 1]} : vector<16x512xf32> to vector<16x128xf32>
    %cst_15 = arith.constant 5.000000e-01 : f32
    %23 = vector.broadcast %cst_15 : f32 to vector<16x128xf32>
    %24 = arith.mulf %23, %22 : vector<16x128xf32>
    %25 = math.tanh %24 : vector<16x128xf32>
    %cst_16 = arith.constant 5.000000e-01 : f32
    %26 = vector.broadcast %cst_16 : f32 to vector<16x128xf32>
    %27 = arith.mulf %26, %25 : vector<16x128xf32>
    %cst_17 = arith.constant 5.000000e-01 : f32
    %28 = vector.broadcast %cst_17 : f32 to vector<16x128xf32>
    %29 = arith.addf %27, %28 : vector<16x128xf32>
    %30 = vector.extract_strided_slice %13 {offsets = [0, 256], sizes = [16, 128], strides = [1, 1]} : vector<16x512xf32> to vector<16x128xf32>
    %31 = math.tanh %30 : vector<16x128xf32>
    %32 = vector.extract_strided_slice %13 {offsets = [0, 384], sizes = [16, 128], strides = [1, 1]} : vector<16x512xf32> to vector<16x128xf32>
    %cst_18 = arith.constant 5.000000e-01 : f32
    %33 = vector.broadcast %cst_18 : f32 to vector<16x128xf32>
    %34 = arith.mulf %33, %32 : vector<16x128xf32>
    %35 = math.tanh %34 : vector<16x128xf32>
    %cst_19 = arith.constant 5.000000e-01 : f32
    %36 = vector.broadcast %cst_19 : f32 to vector<16x128xf32>
    %37 = arith.mulf %36, %35 : vector<16x128xf32>
    %cst_20 = arith.constant 5.000000e-01 : f32
    %38 = vector.broadcast %cst_20 : f32 to vector<16x128xf32>
    %39 = arith.addf %37, %38 : vector<16x128xf32>
    %40 = arith.mulf %29, %10 : vector<16x128xf32>
    %41 = arith.mulf %21, %31 : vector<16x128xf32>
    %42 = arith.addf %40, %41 : vector<16x128xf32>
    %43 = math.tanh %42 : vector<16x128xf32>
    %44 = arith.mulf %39, %43 : vector<16x128xf32>
    %45 = arith.truncf %44 : vector<16x128xf32> to vector<16x128xbf16>
    %cst_21 = arith.constant dense<0.000000e+00> : vector<16x16xf32>
    %46 = tpu.matmul %45, %5, %cst_21 {dimension_numbers = #tpu.dot_dimension_numbers<[1], [0], [0], [1], [0, 0, 1, 1], [], []>} : vector<16x128xbf16>, vector<128x16xbf16>, vector<16x16xf32> -> vector<16x16xf32>
    %47 = arith.addf %46, %8 : vector<16x16xf32>
    %c0_22 = arith.constant 0 : index
    %c0_23 = arith.constant 0 : index
    %48 = vector.load %arg6[%c0_22, %c0_23] : memref<16x128xf32, #tpu.memory_space<vmem>>, vector<16x16xf32>
    tpu.vector_store %arg6[%c0_22, %c0_23], %47 {strides = array<i32>} : memref<16x128xf32, #tpu.memory_space<vmem>>, vector<16x16xf32>,
    %cst_24 = arith.constant dense<0.000000e+00> : vector<16x512xf32>
    %49 = tpu.matmul %45, %4, %cst_24 {dimension_numbers = #tpu.dot_dimension_numbers<[1], [0], [0], [1], [0, 0, 1, 1], [], []>} : vector<16x128xbf16>, vector<128x512xbf16>, vector<16x512xf32> -> vector<16x512xf32>
    %50 = arith.addf %3, %49 : vector<16x512xf32>
    %51 = vector.extract_strided_slice %50 {offsets = [0, 0], sizes = [16, 128], strides = [1, 1]} : vector<16x512xf32> to vector<16x128xf32>
    %cst_25 = arith.constant 5.000000e-01 : f32
    %52 = vector.broadcast %cst_25 : f32 to vector<16x128xf32>
    %53 = arith.mulf %52, %51 : vector<16x128xf32>
    %54 = math.tanh %53 : vector<16x128xf32>
    %cst_26 = arith.constant 5.000000e-01 : f32
    %55 = vector.broadcast %cst_26 : f32 to vector<16x128xf32>
    %56 = arith.mulf %55, %54 : vector<16x128xf32>
    %cst_27 = arith.constant 5.000000e-01 : f32
    %57 = vector.broadcast %cst_27 : f32 to vector<16x128xf32>
    %58 = arith.addf %56, %57 : vector<16x128xf32>
    %59 = vector.extract_strided_slice %50 {offsets = [0, 128], sizes = [16, 128], strides = [1, 1]} : vector<16x512xf32> to vector<16x128xf32>
    %cst_28 = arith.constant 5.000000e-01 : f32
    %60 = vector.broadcast %cst_28 : f32 to vector<16x128xf32>
    %61 = arith.mulf %60, %59 : vector<16x128xf32>
    %62 = math.tanh %61 : vector<16x128xf32>
    %cst_29 = arith.constant 5.000000e-01 : f32
    %63 = vector.broadcast %cst_29 : f32 to vector<16x128xf32>
    %64 = arith.mulf %63, %62 : vector<16x128xf32>
    %cst_30 = arith.constant 5.000000e-01 : f32
    %65 = vector.broadcast %cst_30 : f32 to vector<16x128xf32>
    %66 = arith.addf %64, %65 : vector<16x128xf32>
    %67 = vector.extract_strided_slice %50 {offsets = [0, 256], sizes = [16, 128], strides = [1, 1]} : vector<16x512xf32> to vector<16x128xf32>
    %68 = math.tanh %67 : vector<16x128xf32>
    %69 = vector.extract_strided_slice %50 {offsets = [0, 384], sizes = [16, 128], strides = [1, 1]} : vector<16x512xf32> to vector<16x128xf32>
    %cst_31 = arith.constant 5.000000e-01 : f32
    %70 = vector.broadcast %cst_31 : f32 to vector<16x128xf32>
    %71 = arith.mulf %70, %69 : vector<16x128xf32>
    %72 = math.tanh %71 : vector<16x128xf32>
    %cst_32 = arith.constant 5.000000e-01 : f32
    %73 = vector.broadcast %cst_32 : f32 to vector<16x128xf32>
    %74 = arith.mulf %73, %72 : vector<16x128xf32>
    %cst_33 = arith.constant 5.000000e-01 : f32
    %75 = vector.broadcast %cst_33 : f32 to vector<16x128xf32>
    %76 = arith.addf %74, %75 : vector<16x128xf32>
    %77 = arith.mulf %66, %42 : vector<16x128xf32>
    %78 = arith.mulf %58, %68 : vector<16x128xf32>
    %79 = arith.addf %77, %78 : vector<16x128xf32>
    %80 = math.tanh %79 : vector<16x128xf32>
    %81 = arith.mulf %76, %80 : vector<16x128xf32>
    %82 = arith.truncf %81 : vector<16x128xf32> to vector<16x128xbf16>
    %cst_34 = arith.constant dense<0.000000e+00> : vector<16x16xf32>
    %83 = tpu.matmul %82, %5, %cst_34 {dimension_numbers = #tpu.dot_dimension_numbers<[1], [0], [0], [1], [0, 0, 1, 1], [], []>} : vector<16x128xbf16>, vector<128x16xbf16>, vector<16x16xf32> -> vector<16x16xf32>
    %84 = arith.addf %83, %8 : vector<16x16xf32>
    %c0_35 = arith.constant 0 : index
    %c16 = arith.constant 16 : index
    %85 = vector.load %arg6[%c0_35, %c16] : memref<16x128xf32, #tpu.memory_space<vmem>>, vector<16x16xf32>
    tpu.vector_store %arg6[%c0_35, %c16], %84 {strides = array<i32>} : memref<16x128xf32, #tpu.memory_space<vmem>>, vector<16x16xf32>,
    %cst_36 = arith.constant dense<0.000000e+00> : vector<16x512xf32>
    %86 = tpu.matmul %82, %4, %cst_36 {dimension_numbers = #tpu.dot_dimension_numbers<[1], [0], [0], [1], [0, 0, 1, 1], [], []>} : vector<16x128xbf16>, vector<128x512xbf16>, vector<16x512xf32> -> vector<16x512xf32>
    %87 = arith.addf %3, %86 : vector<16x512xf32>
    %88 = vector.extract_strided_slice %87 {offsets = [0, 0], sizes = [16, 128], strides = [1, 1]} : vector<16x512xf32> to vector<16x128xf32>
    %cst_37 = arith.constant 5.000000e-01 : f32
    %89 = vector.broadcast %cst_37 : f32 to vector<16x128xf32>
    %90 = arith.mulf %89, %88 : vector<16x128xf32>
    %91 = math.tanh %90 : vector<16x128xf32>
    %cst_38 = arith.constant 5.000000e-01 : f32
    %92 = vector.broadcast %cst_38 : f32 to vector<16x128xf32>
    %93 = arith.mulf %92, %91 : vector<16x128xf32>
    %cst_39 = arith.constant 5.000000e-01 : f32
    %94 = vector.broadcast %cst_39 : f32 to vector<16x128xf32>
    %95 = arith.addf %93, %94 : vector<16x128xf32>
    %96 = vector.extract_strided_slice %87 {offsets = [0, 128], sizes = [16, 128], strides = [1, 1]} : vector<16x512xf32> to vector<16x128xf32>
    %cst_40 = arith.constant 5.000000e-01 : f32
    %97 = vector.broadcast %cst_40 : f32 to vector<16x128xf32>
    %98 = arith.mulf %97, %96 : vector<16x128xf32>
    %99 = math.tanh %98 : vector<16x128xf32>
    %cst_41 = arith.constant 5.000000e-01 : f32
    %100 = vector.broadcast %cst_41 : f32 to vector<16x128xf32>
    %101 = arith.mulf %100, %99 : vector<16x128xf32>
    %cst_42 = arith.constant 5.000000e-01 : f32
    %102 = vector.broadcast %cst_42 : f32 to vector<16x128xf32>
    %103 = arith.addf %101, %102 : vector<16x128xf32>
    %104 = vector.extract_strided_slice %87 {offsets = [0, 256], sizes = [16, 128], strides = [1, 1]} : vector<16x512xf32> to vector<16x128xf32>
    %105 = math.tanh %104 : vector<16x128xf32>
    %106 = vector.extract_strided_slice %87 {offsets = [0, 384], sizes = [16, 128], strides = [1, 1]} : vector<16x512xf32> to vector<16x128xf32>
    %cst_43 = arith.constant 5.000000e-01 : f32
    %107 = vector.broadcast %cst_43 : f32 to vector<16x128xf32>
    %108 = arith.mulf %107, %106 : vector<16x128xf32>
    %109 = math.tanh %108 : vector<16x128xf32>
    %cst_44 = arith.constant 5.000000e-01 : f32
    %110 = vector.broadcast %cst_44 : f32 to vector<16x128xf32>
    %111 = arith.mulf %110, %109 : vector<16x128xf32>
    %cst_45 = arith.constant 5.000000e-01 : f32
    %112 = vector.broadcast %cst_45 : f32 to vector<16x128xf32>
    %113 = arith.addf %111, %112 : vector<16x128xf32>
    %114 = arith.mulf %103, %79 : vector<16x128xf32>
    %115 = arith.mulf %95, %105 : vector<16x128xf32>
    %116 = arith.addf %114, %115 : vector<16x128xf32>
    %117 = math.tanh %116 : vector<16x128xf32>
    %118 = arith.mulf %113, %117 : vector<16x128xf32>
    %119 = arith.truncf %118 : vector<16x128xf32> to vector<16x128xbf16>
    %cst_46 = arith.constant dense<0.000000e+00> : vector<16x16xf32>
    %120 = tpu.matmul %119, %5, %cst_46 {dimension_numbers = #tpu.dot_dimension_numbers<[1], [0], [0], [1], [0, 0, 1, 1], [], []>} : vector<16x128xbf16>, vector<128x16xbf16>, vector<16x16xf32> -> vector<16x16xf32>
    %121 = arith.addf %120, %8 : vector<16x16xf32>
    %c0_47 = arith.constant 0 : index
    %c32 = arith.constant 32 : index
    %122 = vector.load %arg6[%c0_47, %c32] : memref<16x128xf32, #tpu.memory_space<vmem>>, vector<16x16xf32>
    tpu.vector_store %arg6[%c0_47, %c32], %121 {strides = array<i32>} : memref<16x128xf32, #tpu.memory_space<vmem>>, vector<16x16xf32>,
    %cst_48 = arith.constant dense<0.000000e+00> : vector<16x512xf32>
    %123 = tpu.matmul %119, %4, %cst_48 {dimension_numbers = #tpu.dot_dimension_numbers<[1], [0], [0], [1], [0, 0, 1, 1], [], []>} : vector<16x128xbf16>, vector<128x512xbf16>, vector<16x512xf32> -> vector<16x512xf32>
    %124 = arith.addf %3, %123 : vector<16x512xf32>
    %125 = vector.extract_strided_slice %124 {offsets = [0, 0], sizes = [16, 128], strides = [1, 1]} : vector<16x512xf32> to vector<16x128xf32>
    %cst_49 = arith.constant 5.000000e-01 : f32
    %126 = vector.broadcast %cst_49 : f32 to vector<16x128xf32>
    %127 = arith.mulf %126, %125 : vector<16x128xf32>
    %128 = math.tanh %127 : vector<16x128xf32>
    %cst_50 = arith.constant 5.000000e-01 : f32
    %129 = vector.broadcast %cst_50 : f32 to vector<16x128xf32>
    %130 = arith.mulf %129, %128 : vector<16x128xf32>
    %cst_51 = arith.constant 5.000000e-01 : f32
    %131 = vector.broadcast %cst_51 : f32 to vector<16x128xf32>
    %132 = arith.addf %130, %131 : vector<16x128xf32>
    %133 = vector.extract_strided_slice %124 {offsets = [0, 128], sizes = [16, 128], strides = [1, 1]} : vector<16x512xf32> to vector<16x128xf32>
    %cst_52 = arith.constant 5.000000e-01 : f32
    %134 = vector.broadcast %cst_52 : f32 to vector<16x128xf32>
    %135 = arith.mulf %134, %133 : vector<16x128xf32>
    %136 = math.tanh %135 : vector<16x128xf32>
    %cst_53 = arith.constant 5.000000e-01 : f32
    %137 = vector.broadcast %cst_53 : f32 to vector<16x128xf32>
    %138 = arith.mulf %137, %136 : vector<16x128xf32>
    %cst_54 = arith.constant 5.000000e-01 : f32
    %139 = vector.broadcast %cst_54 : f32 to vector<16x128xf32>
    %140 = arith.addf %138, %139 : vector<16x128xf32>
    %141 = vector.extract_strided_slice %124 {offsets = [0, 256], sizes = [16, 128], strides = [1, 1]} : vector<16x512xf32> to vector<16x128xf32>
    %142 = math.tanh %141 : vector<16x128xf32>
    %143 = vector.extract_strided_slice %124 {offsets = [0, 384], sizes = [16, 128], strides = [1, 1]} : vector<16x512xf32> to vector<16x128xf32>
    %cst_55 = arith.constant 5.000000e-01 : f32
    %144 = vector.broadcast %cst_55 : f32 to vector<16x128xf32>
    %145 = arith.mulf %144, %143 : vector<16x128xf32>
    %146 = math.tanh %145 : vector<16x128xf32>
    %cst_56 = arith.constant 5.000000e-01 : f32
    %147 = vector.broadcast %cst_56 : f32 to vector<16x128xf32>
    %148 = arith.mulf %147, %146 : vector<16x128xf32>
    %cst_57 = arith.constant 5.000000e-01 : f32
    %149 = vector.broadcast %cst_57 : f32 to vector<16x128xf32>
    %150 = arith.addf %148, %149 : vector<16x128xf32>
    %151 = arith.mulf %140, %116 : vector<16x128xf32>
    %152 = arith.mulf %132, %142 : vector<16x128xf32>
    %153 = arith.addf %151, %152 : vector<16x128xf32>
    %154 = math.tanh %153 : vector<16x128xf32>
    %155 = arith.mulf %150, %154 : vector<16x128xf32>
    %156 = arith.truncf %155 : vector<16x128xf32> to vector<16x128xbf16>
    %cst_58 = arith.constant dense<0.000000e+00> : vector<16x16xf32>
    %157 = tpu.matmul %156, %5, %cst_58 {dimension_numbers = #tpu.dot_dimension_numbers<[1], [0], [0], [1], [0, 0, 1, 1], [], []>} : vector<16x128xbf16>, vector<128x16xbf16>, vector<16x16xf32> -> vector<16x16xf32>
    %158 = arith.addf %157, %8 : vector<16x16xf32>
    %c0_59 = arith.constant 0 : index
    %c48 = arith.constant 48 : index
    %159 = vector.load %arg6[%c0_59, %c48] : memref<16x128xf32, #tpu.memory_space<vmem>>, vector<16x16xf32>
    tpu.vector_store %arg6[%c0_59, %c48], %158 {strides = array<i32>} : memref<16x128xf32, #tpu.memory_space<vmem>>, vector<16x16xf32>,
    %cst_60 = arith.constant dense<0.000000e+00> : vector<16x512xf32>
    %160 = tpu.matmul %156, %4, %cst_60 {dimension_numbers = #tpu.dot_dimension_numbers<[1], [0], [0], [1], [0, 0, 1, 1], [], []>} : vector<16x128xbf16>, vector<128x512xbf16>, vector<16x512xf32> -> vector<16x512xf32>
    %161 = arith.addf %3, %160 : vector<16x512xf32>
    %162 = vector.extract_strided_slice %161 {offsets = [0, 0], sizes = [16, 128], strides = [1, 1]} : vector<16x512xf32> to vector<16x128xf32>
    %cst_61 = arith.constant 5.000000e-01 : f32
    %163 = vector.broadcast %cst_61 : f32 to vector<16x128xf32>
    %164 = arith.mulf %163, %162 : vector<16x128xf32>
    %165 = math.tanh %164 : vector<16x128xf32>
    %cst_62 = arith.constant 5.000000e-01 : f32
    %166 = vector.broadcast %cst_62 : f32 to vector<16x128xf32>
    %167 = arith.mulf %166, %165 : vector<16x128xf32>
    %cst_63 = arith.constant 5.000000e-01 : f32
    %168 = vector.broadcast %cst_63 : f32 to vector<16x128xf32>
    %169 = arith.addf %167, %168 : vector<16x128xf32>
    %170 = vector.extract_strided_slice %161 {offsets = [0, 128], sizes = [16, 128], strides = [1, 1]} : vector<16x512xf32> to vector<16x128xf32>
    %cst_64 = arith.constant 5.000000e-01 : f32
    %171 = vector.broadcast %cst_64 : f32 to vector<16x128xf32>
    %172 = arith.mulf %171, %170 : vector<16x128xf32>
    %173 = math.tanh %172 : vector<16x128xf32>
    %cst_65 = arith.constant 5.000000e-01 : f32
    %174 = vector.broadcast %cst_65 : f32 to vector<16x128xf32>
    %175 = arith.mulf %174, %173 : vector<16x128xf32>
    %cst_66 = arith.constant 5.000000e-01 : f32
    %176 = vector.broadcast %cst_66 : f32 to vector<16x128xf32>
    %177 = arith.addf %175, %176 : vector<16x128xf32>
    %178 = vector.extract_strided_slice %161 {offsets = [0, 256], sizes = [16, 128], strides = [1, 1]} : vector<16x512xf32> to vector<16x128xf32>
    %179 = math.tanh %178 : vector<16x128xf32>
    %180 = vector.extract_strided_slice %161 {offsets = [0, 384], sizes = [16, 128], strides = [1, 1]} : vector<16x512xf32> to vector<16x128xf32>
    %cst_67 = arith.constant 5.000000e-01 : f32
    %181 = vector.broadcast %cst_67 : f32 to vector<16x128xf32>
    %182 = arith.mulf %181, %180 : vector<16x128xf32>
    %183 = math.tanh %182 : vector<16x128xf32>
    %cst_68 = arith.constant 5.000000e-01 : f32
    %184 = vector.broadcast %cst_68 : f32 to vector<16x128xf32>
    %185 = arith.mulf %184, %183 : vector<16x128xf32>
    %cst_69 = arith.constant 5.000000e-01 : f32
    %186 = vector.broadcast %cst_69 : f32 to vector<16x128xf32>
    %187 = arith.addf %185, %186 : vector<16x128xf32>
    %188 = arith.mulf %177, %153 : vector<16x128xf32>
    %189 = arith.mulf %169, %179 : vector<16x128xf32>
    %190 = arith.addf %188, %189 : vector<16x128xf32>
    %191 = math.tanh %190 : vector<16x128xf32>
    %192 = arith.mulf %187, %191 : vector<16x128xf32>
    %193 = arith.truncf %192 : vector<16x128xf32> to vector<16x128xbf16>
    %cst_70 = arith.constant dense<0.000000e+00> : vector<16x16xf32>
    %194 = tpu.matmul %193, %5, %cst_70 {dimension_numbers = #tpu.dot_dimension_numbers<[1], [0], [0], [1], [0, 0, 1, 1], [], []>} : vector<16x128xbf16>, vector<128x16xbf16>, vector<16x16xf32> -> vector<16x16xf32>
    %195 = arith.addf %194, %8 : vector<16x16xf32>
    %c0_71 = arith.constant 0 : index
    %c64 = arith.constant 64 : index
    %196 = vector.load %arg6[%c0_71, %c64] : memref<16x128xf32, #tpu.memory_space<vmem>>, vector<16x16xf32>
    tpu.vector_store %arg6[%c0_71, %c64], %195 {strides = array<i32>} : memref<16x128xf32, #tpu.memory_space<vmem>>, vector<16x16xf32>,
    %cst_72 = arith.constant dense<0.000000e+00> : vector<16x512xf32>
    %197 = tpu.matmul %193, %4, %cst_72 {dimension_numbers = #tpu.dot_dimension_numbers<[1], [0], [0], [1], [0, 0, 1, 1], [], []>} : vector<16x128xbf16>, vector<128x512xbf16>, vector<16x512xf32> -> vector<16x512xf32>
    %198 = arith.addf %3, %197 : vector<16x512xf32>
    %199 = vector.extract_strided_slice %198 {offsets = [0, 0], sizes = [16, 128], strides = [1, 1]} : vector<16x512xf32> to vector<16x128xf32>
    %cst_73 = arith.constant 5.000000e-01 : f32
    %200 = vector.broadcast %cst_73 : f32 to vector<16x128xf32>
    %201 = arith.mulf %200, %199 : vector<16x128xf32>
    %202 = math.tanh %201 : vector<16x128xf32>
    %cst_74 = arith.constant 5.000000e-01 : f32
    %203 = vector.broadcast %cst_74 : f32 to vector<16x128xf32>
    %204 = arith.mulf %203, %202 : vector<16x128xf32>
    %cst_75 = arith.constant 5.000000e-01 : f32
    %205 = vector.broadcast %cst_75 : f32 to vector<16x128xf32>
    %206 = arith.addf %204, %205 : vector<16x128xf32>
    %207 = vector.extract_strided_slice %198 {offsets = [0, 128], sizes = [16, 128], strides = [1, 1]} : vector<16x512xf32> to vector<16x128xf32>
    %cst_76 = arith.constant 5.000000e-01 : f32
    %208 = vector.broadcast %cst_76 : f32 to vector<16x128xf32>
    %209 = arith.mulf %208, %207 : vector<16x128xf32>
    %210 = math.tanh %209 : vector<16x128xf32>
    %cst_77 = arith.constant 5.000000e-01 : f32
    %211 = vector.broadcast %cst_77 : f32 to vector<16x128xf32>
    %212 = arith.mulf %211, %210 : vector<16x128xf32>
    %cst_78 = arith.constant 5.000000e-01 : f32
    %213 = vector.broadcast %cst_78 : f32 to vector<16x128xf32>
    %214 = arith.addf %212, %213 : vector<16x128xf32>
    %215 = vector.extract_strided_slice %198 {offsets = [0, 256], sizes = [16, 128], strides = [1, 1]} : vector<16x512xf32> to vector<16x128xf32>
    %216 = math.tanh %215 : vector<16x128xf32>
    %217 = vector.extract_strided_slice %198 {offsets = [0, 384], sizes = [16, 128], strides = [1, 1]} : vector<16x512xf32> to vector<16x128xf32>
    %cst_79 = arith.constant 5.000000e-01 : f32
    %218 = vector.broadcast %cst_79 : f32 to vector<16x128xf32>
    %219 = arith.mulf %218, %217 : vector<16x128xf32>
    %220 = math.tanh %219 : vector<16x128xf32>
    %cst_80 = arith.constant 5.000000e-01 : f32
    %221 = vector.broadcast %cst_80 : f32 to vector<16x128xf32>
    %222 = arith.mulf %221, %220 : vector<16x128xf32>
    %cst_81 = arith.constant 5.000000e-01 : f32
    %223 = vector.broadcast %cst_81 : f32 to vector<16x128xf32>
    %224 = arith.addf %222, %223 : vector<16x128xf32>
    %225 = arith.mulf %214, %190 : vector<16x128xf32>
    %226 = arith.mulf %206, %216 : vector<16x128xf32>
    %227 = arith.addf %225, %226 : vector<16x128xf32>
    %228 = math.tanh %227 : vector<16x128xf32>
    %229 = arith.mulf %224, %228 : vector<16x128xf32>
    %230 = arith.truncf %229 : vector<16x128xf32> to vector<16x128xbf16>
    %cst_82 = arith.constant dense<0.000000e+00> : vector<16x16xf32>
    %231 = tpu.matmul %230, %5, %cst_82 {dimension_numbers = #tpu.dot_dimension_numbers<[1], [0], [0], [1], [0, 0, 1, 1], [], []>} : vector<16x128xbf16>, vector<128x16xbf16>, vector<16x16xf32> -> vector<16x16xf32>
    %232 = arith.addf %231, %8 : vector<16x16xf32>
    %c0_83 = arith.constant 0 : index
    %c80 = arith.constant 80 : index
    %233 = vector.load %arg6[%c0_83, %c80] : memref<16x128xf32, #tpu.memory_space<vmem>>, vector<16x16xf32>
    tpu.vector_store %arg6[%c0_83, %c80], %232 {strides = array<i32>} : memref<16x128xf32, #tpu.memory_space<vmem>>, vector<16x16xf32>,
    %cst_84 = arith.constant dense<0.000000e+00> : vector<16x512xf32>
    %234 = tpu.matmul %230, %4, %cst_84 {dimension_numbers = #tpu.dot_dimension_numbers<[1], [0], [0], [1], [0, 0, 1, 1], [], []>} : vector<16x128xbf16>, vector<128x512xbf16>, vector<16x512xf32> -> vector<16x512xf32>
    %235 = arith.addf %3, %234 : vector<16x512xf32>
    %236 = vector.extract_strided_slice %235 {offsets = [0, 0], sizes = [16, 128], strides = [1, 1]} : vector<16x512xf32> to vector<16x128xf32>
    %cst_85 = arith.constant 5.000000e-01 : f32
    %237 = vector.broadcast %cst_85 : f32 to vector<16x128xf32>
    %238 = arith.mulf %237, %236 : vector<16x128xf32>
    %239 = math.tanh %238 : vector<16x128xf32>
    %cst_86 = arith.constant 5.000000e-01 : f32
    %240 = vector.broadcast %cst_86 : f32 to vector<16x128xf32>
    %241 = arith.mulf %240, %239 : vector<16x128xf32>
    %cst_87 = arith.constant 5.000000e-01 : f32
    %242 = vector.broadcast %cst_87 : f32 to vector<16x128xf32>
    %243 = arith.addf %241, %242 : vector<16x128xf32>
    %244 = vector.extract_strided_slice %235 {offsets = [0, 128], sizes = [16, 128], strides = [1, 1]} : vector<16x512xf32> to vector<16x128xf32>
    %cst_88 = arith.constant 5.000000e-01 : f32
    %245 = vector.broadcast %cst_88 : f32 to vector<16x128xf32>
    %246 = arith.mulf %245, %244 : vector<16x128xf32>
    %247 = math.tanh %246 : vector<16x128xf32>
    %cst_89 = arith.constant 5.000000e-01 : f32
    %248 = vector.broadcast %cst_89 : f32 to vector<16x128xf32>
    %249 = arith.mulf %248, %247 : vector<16x128xf32>
    %cst_90 = arith.constant 5.000000e-01 : f32
    %250 = vector.broadcast %cst_90 : f32 to vector<16x128xf32>
    %251 = arith.addf %249, %250 : vector<16x128xf32>
    %252 = vector.extract_strided_slice %235 {offsets = [0, 256], sizes = [16, 128], strides = [1, 1]} : vector<16x512xf32> to vector<16x128xf32>
    %253 = math.tanh %252 : vector<16x128xf32>
    %254 = vector.extract_strided_slice %235 {offsets = [0, 384], sizes = [16, 128], strides = [1, 1]} : vector<16x512xf32> to vector<16x128xf32>
    %cst_91 = arith.constant 5.000000e-01 : f32
    %255 = vector.broadcast %cst_91 : f32 to vector<16x128xf32>
    %256 = arith.mulf %255, %254 : vector<16x128xf32>
    %257 = math.tanh %256 : vector<16x128xf32>
    %cst_92 = arith.constant 5.000000e-01 : f32
    %258 = vector.broadcast %cst_92 : f32 to vector<16x128xf32>
    %259 = arith.mulf %258, %257 : vector<16x128xf32>
    %cst_93 = arith.constant 5.000000e-01 : f32
    %260 = vector.broadcast %cst_93 : f32 to vector<16x128xf32>
    %261 = arith.addf %259, %260 : vector<16x128xf32>
    %262 = arith.mulf %251, %227 : vector<16x128xf32>
    %263 = arith.mulf %243, %253 : vector<16x128xf32>
    %264 = arith.addf %262, %263 : vector<16x128xf32>
    %265 = math.tanh %264 : vector<16x128xf32>
    %266 = arith.mulf %261, %265 : vector<16x128xf32>
    %267 = arith.truncf %266 : vector<16x128xf32> to vector<16x128xbf16>
    %cst_94 = arith.constant dense<0.000000e+00> : vector<16x16xf32>
    %268 = tpu.matmul %267, %5, %cst_94 {dimension_numbers = #tpu.dot_dimension_numbers<[1], [0], [0], [1], [0, 0, 1, 1], [], []>} : vector<16x128xbf16>, vector<128x16xbf16>, vector<16x16xf32> -> vector<16x16xf32>
    %269 = arith.addf %268, %8 : vector<16x16xf32>
    %c0_95 = arith.constant 0 : index
    %c96 = arith.constant 96 : index
    %270 = vector.load %arg6[%c0_95, %c96] : memref<16x128xf32, #tpu.memory_space<vmem>>, vector<16x16xf32>
    tpu.vector_store %arg6[%c0_95, %c96], %269 {strides = array<i32>} : memref<16x128xf32, #tpu.memory_space<vmem>>, vector<16x16xf32>,
    %cst_96 = arith.constant dense<0.000000e+00> : vector<16x512xf32>
    %271 = tpu.matmul %267, %4, %cst_96 {dimension_numbers = #tpu.dot_dimension_numbers<[1], [0], [0], [1], [0, 0, 1, 1], [], []>} : vector<16x128xbf16>, vector<128x512xbf16>, vector<16x512xf32> -> vector<16x512xf32>
    %272 = arith.addf %3, %271 : vector<16x512xf32>
    %273 = vector.extract_strided_slice %272 {offsets = [0, 0], sizes = [16, 128], strides = [1, 1]} : vector<16x512xf32> to vector<16x128xf32>
    %cst_97 = arith.constant 5.000000e-01 : f32
    %274 = vector.broadcast %cst_97 : f32 to vector<16x128xf32>
    %275 = arith.mulf %274, %273 : vector<16x128xf32>
    %276 = math.tanh %275 : vector<16x128xf32>
    %cst_98 = arith.constant 5.000000e-01 : f32
    %277 = vector.broadcast %cst_98 : f32 to vector<16x128xf32>
    %278 = arith.mulf %277, %276 : vector<16x128xf32>
    %cst_99 = arith.constant 5.000000e-01 : f32
    %279 = vector.broadcast %cst_99 : f32 to vector<16x128xf32>
    %280 = arith.addf %278, %279 : vector<16x128xf32>
    %281 = vector.extract_strided_slice %272 {offsets = [0, 128], sizes = [16, 128], strides = [1, 1]} : vector<16x512xf32> to vector<16x128xf32>
    %cst_100 = arith.constant 5.000000e-01 : f32
    %282 = vector.broadcast %cst_100 : f32 to vector<16x128xf32>
    %283 = arith.mulf %282, %281 : vector<16x128xf32>
    %284 = math.tanh %283 : vector<16x128xf32>
    %cst_101 = arith.constant 5.000000e-01 : f32
    %285 = vector.broadcast %cst_101 : f32 to vector<16x128xf32>
    %286 = arith.mulf %285, %284 : vector<16x128xf32>
    %cst_102 = arith.constant 5.000000e-01 : f32
    %287 = vector.broadcast %cst_102 : f32 to vector<16x128xf32>
    %288 = arith.addf %286, %287 : vector<16x128xf32>
    %289 = vector.extract_strided_slice %272 {offsets = [0, 256], sizes = [16, 128], strides = [1, 1]} : vector<16x512xf32> to vector<16x128xf32>
    %290 = math.tanh %289 : vector<16x128xf32>
    %291 = vector.extract_strided_slice %272 {offsets = [0, 384], sizes = [16, 128], strides = [1, 1]} : vector<16x512xf32> to vector<16x128xf32>
    %cst_103 = arith.constant 5.000000e-01 : f32
    %292 = vector.broadcast %cst_103 : f32 to vector<16x128xf32>
    %293 = arith.mulf %292, %291 : vector<16x128xf32>
    %294 = math.tanh %293 : vector<16x128xf32>
    %cst_104 = arith.constant 5.000000e-01 : f32
    %295 = vector.broadcast %cst_104 : f32 to vector<16x128xf32>
    %296 = arith.mulf %295, %294 : vector<16x128xf32>
    %cst_105 = arith.constant 5.000000e-01 : f32
    %297 = vector.broadcast %cst_105 : f32 to vector<16x128xf32>
    %298 = arith.addf %296, %297 : vector<16x128xf32>
    %299 = arith.mulf %288, %264 : vector<16x128xf32>
    %300 = arith.mulf %280, %290 : vector<16x128xf32>
    %301 = arith.addf %299, %300 : vector<16x128xf32>
    %302 = math.tanh %301 : vector<16x128xf32>
    %303 = arith.mulf %298, %302 : vector<16x128xf32>
    %304 = arith.truncf %303 : vector<16x128xf32> to vector<16x128xbf16>
    %cst_106 = arith.constant dense<0.000000e+00> : vector<16x16xf32>
    %305 = tpu.matmul %304, %5, %cst_106 {dimension_numbers = #tpu.dot_dimension_numbers<[1], [0], [0], [1], [0, 0, 1, 1], [], []>} : vector<16x128xbf16>, vector<128x16xbf16>, vector<16x16xf32> -> vector<16x16xf32>
    %306 = arith.addf %305, %8 : vector<16x16xf32>
    %c0_107 = arith.constant 0 : index
    %c112 = arith.constant 112 : index
    %307 = vector.load %arg6[%c0_107, %c112] : memref<16x128xf32, #tpu.memory_space<vmem>>, vector<16x16xf32>
    tpu.vector_store %arg6[%c0_107, %c112], %306 {strides = array<i32>} : memref<16x128xf32, #tpu.memory_space<vmem>>, vector<16x16xf32>,
    %c0_108 = arith.constant 0 : index
    %c0_109 = arith.constant 0 : index
    %308 = vector.load %arg7[%c0_108, %c0_109] : memref<16x128xf32, #tpu.memory_space<vmem>>, vector<16x128xf32>
    tpu.vector_store %arg7[%c0_108, %c0_109], %303 {strides = array<i32>} : memref<16x128xf32, #tpu.memory_space<vmem>>, vector<16x128xf32>,
    %c0_110 = arith.constant 0 : index
    %c0_111 = arith.constant 0 : index
    %309 = vector.load %arg8[%c0_110, %c0_111] : memref<16x128xf32, #tpu.memory_space<vmem>>, vector<16x128xf32>
    tpu.vector_store %arg8[%c0_110, %c0_111], %301 {strides = array<i32>} : memref<16x128xf32, #tpu.memory_space<vmem>>, vector<16x128xf32>,
    return
  }
  func.func @transform_0(%arg0: i32, %arg1: i32) -> (i32, i32) {
    %c0_i32 = arith.constant 0 : i32
    %c0_i32_0 = arith.constant 0 : i32
    return %arg0, %c0_i32 : i32, i32
  }
  func.func @transform_1(%arg0: i32, %arg1: i32) -> (i32, i32) {
    %c0_i32 = arith.constant 0 : i32
    %c0_i32_0 = arith.constant 0 : i32
    %c0_i32_1 = arith.constant 0 : i32
    return %c0_i32, %c0_i32_0 : i32, i32
  }
  func.func @transform_2(%arg0: i32, %arg1: i32) -> (i32, i32) {
    %c0_i32 = arith.constant 0 : i32
    %c0_i32_0 = arith.constant 0 : i32
    %c0_i32_1 = arith.constant 0 : i32
    return %c0_i32, %c0_i32_0 : i32, i32
  }
  func.func @transform_3(%arg0: i32, %arg1: i32) -> (i32, i32) {
    %c0_i32 = arith.constant 0 : i32
    %c0_i32_0 = arith.constant 0 : i32
    %c0_i32_1 = arith.constant 0 : i32
    return %c0_i32, %c0_i32_0 : i32, i32
  }
  func.func @transform_4(%arg0: i32, %arg1: i32) -> (i32, i32) {
    %c0_i32 = arith.constant 0 : i32
    return %arg0, %arg1 : i32, i32
  }
}

</mosaic_0001>

<llo_original>
// kernel: bilstm_decoder_forward.1
$region0: #{bilstm_decoder_forward.1}
  #allocation0 [shape = 'u32[]', space=smem, size = 0x4, offset = 0x4, fixed_abs, tag = 'smem constant byte address 0x4 - core index']
  #allocation1 [shape = 'u32[144,128]{1,0:T(1,128)}', space=vmem, size = 0x12000, scoped, tag = 'internal scratch']
  #allocation2 [shape = 'f32[16,128]{1,0:T(8,128)}', space=vmem, size = 0x2000, scoped, tag = 'scratch operand']
  #allocation3 [shape = 'f32[16,128]{1,0:T(8,128)}', space=vmem, size = 0x2000, scoped, tag = 'scratch operand']
  %s0 = inlined_call_operand.vmem [shape: f32[16,512], index: 0, kind: input, shape index: {}]
  %s1 = inlined_call_operand.vmem [shape: bf16[128,512], index: 1, kind: input, shape index: {}]
  %s2 = inlined_call_operand.vmem [shape: bf16[128,16], index: 2, kind: input, shape index: {}]
  %s3 = inlined_call_operand.vmem [shape: f32[1,16], index: 3, kind: input, shape index: {}]
  %s4 = inlined_call_operand.vmem [shape: f32[16,128], index: 4, kind: output, shape index: {}]
  %s5 = sld [smem:[#allocation0]]
  $region30: #{bilstm_decoder_forward.1} parent=0
    _
  %s7 = ssub.s32 1, %s5
  %s8 = scalar_select 0, %s7, %s5
  // Predicated region
  $region2: #{bilstm_decoder_forward.1} parent=0 // pred_check
    _
  $region3: #{bilstm_decoder_forward.1} parent=0 // pred_check_branch
    %10 = sbr.rel (0) target = $region5
  $region4: #{bilstm_decoder_forward.1} parent=0 // pred_region
    _
  $region5: #{bilstm_decoder_forward.1} parent=0 // pred_fallthru
    _
  // Predicated region
  $region6: #{bilstm_decoder_forward.1} parent=0 // pred_check
    _
  $region7: #{bilstm_decoder_forward.1} parent=0 // pred_check_branch
    %12 = sbr.rel (0) target = $region9
  $region8: #{bilstm_decoder_forward.1} parent=0 // pred_region
    _
  $region9: #{bilstm_decoder_forward.1} parent=0 // pred_fallthru
    _
  // Predicated region
  $region10: #{bilstm_decoder_forward.1} parent=0 // pred_check
    _
  $region11: #{bilstm_decoder_forward.1} parent=0 // pred_check_branch
    %14 = sbr.rel (0) target = $region13
  $region12: #{bilstm_decoder_forward.1} parent=0 // pred_region
    _
  $region13: #{bilstm_decoder_forward.1} parent=0 // pred_fallthru
    _
  // Predicated region
  $region14: #{bilstm_decoder_forward.1} parent=0 // pred_check
    _
  $region15: #{bilstm_decoder_forward.1} parent=0 // pred_check_branch
    %16 = sbr.rel (0) target = $region17
  $region16: #{bilstm_decoder_forward.1} parent=0 // pred_region
    _
  $region17: #{bilstm_decoder_forward.1} parent=0 // pred_fallthru
    _
  %p18 = scmp.eq.s32.totalorder 0, 0
  // Predicated region
  $region18: #{bilstm_decoder_forward.1} parent=0 // pred_check
    %p19 = pneg %p18
  $region19: #{bilstm_decoder_forward.1} parent=0 // pred_check_branch
    %21 = sbr.rel (%p19) target = $region21
  $region20: #{bilstm_decoder_forward.1} parent=0 // pred_region
    %22 = vst [vmem:[#allocation2] sm:$0xff] 0.0
    %23 = vst [vmem:[#allocation2 + $0x8] sm:$0xff] 0.0
    %24 = vst [vmem:[#allocation3] sm:$0xff] 0.0
    %25 = vst [vmem:[#allocation3 + $0x8] sm:$0xff] 0.0
  $region21: #{bilstm_decoder_forward.1} parent=0 // pred_fallthru
    _
  %v26 = vld [vmem:[%s0] sm:$0xff]
  %v27 = vld [vmem:[%s0 + $0x8] sm:$0xff]
  %v28 = vld [vmem:[%s0 + $0x10] sm:$0xff]
  %v29 = vld [vmem:[%s0 + $0x18] sm:$0xff]
  %v30 = vld [vmem:[%s0 + $0x20] sm:$0xff]
  %v31 = vld [vmem:[%s0 + $0x28] sm:$0xff]
  %v32 = vld [vmem:[%s0 + $0x30] sm:$0xff]
  %v33 = vld [vmem:[%s0 + $0x38] sm:$0xff]
  %v34 = vld [vmem:[%s1] sm:$0xff]
  %v35 = vld [vmem:[%s1 + $0x8] sm:$0xff]
  %v36 = vld [vmem:[%s1 + $0x10] sm:$0xff]
  %v37 = vld [vmem:[%s1 + $0x18] sm:$0xff]
  %v38 = vld [vmem:[%s1 + $0x20] sm:$0xff]
  %v39 = vld [vmem:[%s1 + $0x28] sm:$0xff]
  %v40 = vld [vmem:[%s1 + $0x30] sm:$0xff]
  %v41 = vld [vmem:[%s1 + $0x38] sm:$0xff]
  %v42 = vld [vmem:[%s1 + $0x40] sm:$0xff]
  %v43 = vld [vmem:[%s1 + $0x48] sm:$0xff]
  %v44 = vld [vmem:[%s1 + $0x50] sm:$0xff]
  %v45 = vld [vmem:[%s1 + $0x58] sm:$0xff]
  %v46 = vld [vmem:[%s1 + $0x60] sm:$0xff]
  %v47 = vld [vmem:[%s1 + $0x68] sm:$0xff]
  %v48 = vld [vmem:[%s1 + $0x70] sm:$0xff]
  %v49 = vld [vmem:[%s1 + $0x78] sm:$0xff]
  %v50 = vld [vmem:[%s1 + $0x80] sm:$0xff]
  %v51 = vld [vmem:[%s1 + $0x88] sm:$0xff]
  %v52 = vld [vmem:[%s1 + $0x90] sm:$0xff]
  %v53 = vld [vmem:[%s1 + $0x98] sm:$0xff]
  %v54 = vld [vmem:[%s1 + $0xa0] sm:$0xff]
  %v55 = vld [vmem:[%s1 + $0xa8] sm:$0xff]
  %v56 = vld [vmem:[%s1 + $0xb0] sm:$0xff]
  %v57 = vld [vmem:[%s1 + $0xb8] sm:$0xff]
  %v58 = vld [vmem:[%s1 + $0xc0] sm:$0xff]
  %v59 = vld [vmem:[%s1 + $0xc8] sm:$0xff]
  %v60 = vld [vmem:[%s1 + $0xd0] sm:$0xff]
  %v61 = vld [vmem:[%s1 + $0xd8] sm:$0xff]
  %v62 = vld [vmem:[%s1 + $0xe0] sm:$0xff]
  %v63 = vld [vmem:[%s1 + $0xe8] sm:$0xff]
  %v64 = vld [vmem:[%s1 + $0xf0] sm:$0xff]
  %v65 = vld [vmem:[%s1 + $0xf8] sm:$0xff]
  %v66 = vld [vmem:[%s2] sm:$0xf]
  %v67 = vld [vmem:[%s2 + $0x4] sm:$0xf]
  %v68 = vld [vmem:[%s2 + $0x8] sm:$0xf]
  %v69 = vld [vmem:[%s2 + $0xc] sm:$0xf]
  %v70 = vld [vmem:[%s2 + $0x10] sm:$0xf]
  %v71 = vld [vmem:[%s2 + $0x14] sm:$0xf]
  %v72 = vld [vmem:[%s2 + $0x18] sm:$0xf]
  %v73 = vld [vmem:[%s2 + $0x1c] sm:$0xf]
  %v74 = vld [vmem:[%s2 + $0x20] sm:$0xf]
  %v75 = vld [vmem:[%s2 + $0x24] sm:$0xf]
  %v76 = vld [vmem:[%s2 + $0x28] sm:$0xf]
  %v77 = vld [vmem:[%s2 + $0x2c] sm:$0xf]
  %v78 = vld [vmem:[%s2 + $0x30] sm:$0xf]
  %v79 = vld [vmem:[%s2 + $0x34] sm:$0xf]
  %v80 = vld [vmem:[%s2 + $0x38] sm:$0xf]
  %v81 = vld [vmem:[%s2 + $0x3c] sm:$0xf]
  %v82 = vld [vmem:[%s3] sm:$0x1]
  %v84 = vlaneseq
  %v85 = vshrl.u32 %v84, 7
  %v86 = vsub.s32 0, %v85
  %v87 = vrot.slane %v82, %v86
  %v89 = vld [vmem:[#allocation2] sm:$0xff]
  %v90 = vld [vmem:[#allocation2 + $0x8] sm:$0xff]
  %v91 = vld [vmem:[#allocation3] sm:$0xff]
  %v92 = vld [vmem:[#allocation3 + $0x8] sm:$0xff]
  %v93 = vpack.c.bf16 %v90, %v89
  %v126 = vunpack.c.l.b16 %v34
  %v127 = vunpack.c.h.b16 %v34
  %v128 = vunpack.c.l.b16 %v35
  %v129 = vunpack.c.h.b16 %v35
  %v130 = vunpack.c.l.b16 %v36
  %v131 = vunpack.c.h.b16 %v36
  %v132 = vunpack.c.l.b16 %v37
  %v133 = vunpack.c.h.b16 %v37
  %v134 = vunpack.c.l.b16 %v38
  %v135 = vunpack.c.h.b16 %v38
  %v136 = vunpack.c.l.b16 %v39
  %v137 = vunpack.c.h.b16 %v39
  %v138 = vunpack.c.l.b16 %v40
  %v139 = vunpack.c.h.b16 %v40
  %v140 = vunpack.c.l.b16 %v41
  %v141 = vunpack.c.h.b16 %v41
  %v142 = vunpack.c.l.b16 %v42
  %v143 = vunpack.c.h.b16 %v42
  %v144 = vunpack.c.l.b16 %v43
  %v145 = vunpack.c.h.b16 %v43
  %v146 = vunpack.c.l.b16 %v44
  %v147 = vunpack.c.h.b16 %v44
  %v148 = vunpack.c.l.b16 %v45
  %v149 = vunpack.c.h.b16 %v45
  %v150 = vunpack.c.l.b16 %v46
  %v151 = vunpack.c.h.b16 %v46
  %v152 = vunpack.c.l.b16 %v47
  %v153 = vunpack.c.h.b16 %v47
  %v154 = vunpack.c.l.b16 %v48
  %v155 = vunpack.c.h.b16 %v48
  %v156 = vunpack.c.l.b16 %v49
  %v157 = vunpack.c.h.b16 %v49
  %v158 = vunpack.c.l.b16 %v50
  %v159 = vunpack.c.h.b16 %v50
  %v160 = vunpack.c.l.b16 %v51
  %v161 = vunpack.c.h.b16 %v51
  %v162 = vunpack.c.l.b16 %v52
  %v163 = vunpack.c.h.b16 %v52
  %v164 = vunpack.c.l.b16 %v53
  %v165 = vunpack.c.h.b16 %v53
  %v166 = vunpack.c.l.b16 %v54
  %v167 = vunpack.c.h.b16 %v54
  %v168 = vunpack.c.l.b16 %v55
  %v169 = vunpack.c.h.b16 %v55
  %v170 = vunpack.c.l.b16 %v56
  %v171 = vunpack.c.h.b16 %v56
  %v172 = vunpack.c.l.b16 %v57
  %v173 = vunpack.c.h.b16 %v57
  %v174 = vunpack.c.l.b16 %v58
  %v175 = vunpack.c.h.b16 %v58
  %v176 = vunpack.c.l.b16 %v59
  %v177 = vunpack.c.h.b16 %v59
  %v178 = vunpack.c.l.b16 %v60
  %v179 = vunpack.c.h.b16 %v60
  %v180 = vunpack.c.l.b16 %v61
  %v181 = vunpack.c.h.b16 %v61
  %v182 = vunpack.c.l.b16 %v62
  %v183 = vunpack.c.h.b16 %v62
  %v184 = vunpack.c.l.b16 %v63
  %v185 = vunpack.c.h.b16 %v63
  %v186 = vunpack.c.l.b16 %v64
  %v187 = vunpack.c.h.b16 %v64
  %v188 = vunpack.c.l.b16 %v65
  %v189 = vunpack.c.h.b16 %v65
  %v190 = vpack.c.b16 %v130, %v126
  %v191 = vpack.c.b16 %v131, %v127
  %v192 = vpack.c.b16 %v132, %v128
  %v193 = vpack.c.b16 %v133, %v129
  %v194 = vpack.c.b16 %v138, %v134
  %v195 = vpack.c.b16 %v139, %v135
  %v196 = vpack.c.b16 %v140, %v136
  %v197 = vpack.c.b16 %v141, %v137
  %v198 = vpack.c.b16 %v146, %v142
  %v199 = vpack.c.b16 %v147, %v143
  %v200 = vpack.c.b16 %v148, %v144
  %v201 = vpack.c.b16 %v149, %v145
  %v202 = vpack.c.b16 %v154, %v150
  %v203 = vpack.c.b16 %v155, %v151
  %v204 = vpack.c.b16 %v156, %v152
  %v205 = vpack.c.b16 %v157, %v153
  %v206 = vpack.c.b16 %v162, %v158
  %v207 = vpack.c.b16 %v163, %v159
  %v208 = vpack.c.b16 %v164, %v160
  %v209 = vpack.c.b16 %v165, %v161
  %v210 = vpack.c.b16 %v170, %v166
  %v211 = vpack.c.b16 %v171, %v167
  %v212 = vpack.c.b16 %v172, %v168
  %v213 = vpack.c.b16 %v173, %v169
  %v214 = vpack.c.b16 %v178, %v174
  %v215 = vpack.c.b16 %v179, %v175
  %v216 = vpack.c.b16 %v180, %v176
  %v217 = vpack.c.b16 %v181, %v177
  %v218 = vpack.c.b16 %v186, %v182
  %v219 = vpack.c.b16 %v187, %v183
  %v220 = vpack.c.b16 %v188, %v184
  %v221 = vpack.c.b16 %v189, %v185
  %254 = vmatprep.subr.bf16.mxu0 %v219
  %255 = vmatpush1.bf16.msra.mxu0 %v218
  %256 = vmatprep.subr.bf16.mxu0 %v215
  %257 = vmatpush1.bf16.msra.mxu0 %v214
  %258 = vmatprep.subr.bf16.mxu0 %v211
  %259 = vmatpush1.bf16.msra.mxu0 %v210
  %260 = vmatprep.subr.bf16.mxu0 %v207
  %261 = vmatpush1.bf16.msra.mxu0 %v206
  %262 = vmatprep.subr.bf16.mxu0 %v203
  %263 = vmatpush1.bf16.msra.mxu0 %v202
  %264 = vmatprep.subr.bf16.mxu0 %v199
  %265 = vmatpush1.bf16.msra.mxu0 %v198
  %266 = vmatprep.subr.bf16.mxu0 %v195
  %267 = vmatpush1.bf16.msra.mxu0 %v194
  %268 = vmatprep.subr.bf16.mxu0 %v191
  %269 = vmatpush1.bf16.msra.mxu0 %v190
  %270 = vmatprep.subr.bf16.mxu0 0
  %271 = vmatpush2.bf16.msra.mxu0 0
  %272 = vmatprep.subr.bf16.mxu0 0
  %273 = vmatpush2.bf16.msra.mxu0 0
  %274 = vmatprep.subr.bf16.mxu0 0
  %275 = vmatpush2.bf16.msra.mxu0 0
  %276 = vmatprep.subr.bf16.mxu0 0
  %277 = vmatpush2.bf16.msra.mxu0 0
  %278 = vmatprep.subr.bf16.mxu0 0
  %279 = vmatpush2.bf16.msra.mxu0 0
  %280 = vmatprep.subr.bf16.mxu0 0
  %281 = vmatpush2.bf16.msra.mxu0 0
  %282 = vmatprep.subr.bf16.mxu0 0
  %283 = vmatpush2.bf16.msra.mxu0 0
  %284 = vmatprep.subr.bf16.mxu0 0
  %285 = vmatpush2.bf16.msra.mxu0 0
  %286 = vmatprep.mubr.bf16.mxu0 0
  %287 = vmatmul.mubr.bf16.gmra.mxu0 %v93
  %v288 = vpop.f32.mrf.mxu0
  %v289 = vadd.f32 0.0, %v288
  %v290 = vpop.f32.mrf.mxu0
  %v291 = vadd.f32 0.0, %v290
  %v292 = vpop.f32.mrf.mxu0
  %v293 = vadd.f32 0.0, %v292
  %v294 = vpop.f32.mrf.mxu0
  %v295 = vadd.f32 0.0, %v294
  %296 = vdwg.mxu0
  %297 = vmatprep.subr.bf16.mxu0 %v221
  %298 = vmatpush1.bf16.msra.mxu0 %v220
  %299 = vmatprep.subr.bf16.mxu0 %v217
  %300 = vmatpush1.bf16.msra.mxu0 %v216
  %301 = vmatprep.subr.bf16.mxu0 %v213
  %302 = vmatpush1.bf16.msra.mxu0 %v212
  %303 = vmatprep.subr.bf16.mxu0 %v209
  %304 = vmatpush1.bf16.msra.mxu0 %v208
  %305 = vmatprep.subr.bf16.mxu0 %v205
  %306 = vmatpush1.bf16.msra.mxu0 %v204
  %307 = vmatprep.subr.bf16.mxu0 %v201
  %308 = vmatpush1.bf16.msra.mxu0 %v200
  %309 = vmatprep.subr.bf16.mxu0 %v197
  %310 = vmatpush1.bf16.msra.mxu0 %v196
  %311 = vmatprep.subr.bf16.mxu0 %v193
  %312 = vmatpush1.bf16.msra.mxu0 %v192
  %313 = vmatprep.subr.bf16.mxu0 0
  %314 = vmatpush2.bf16.msra.mxu0 0
  %315 = vmatprep.subr.bf16.mxu0 0
  %316 = vmatpush2.bf16.msra.mxu0 0
  %317 = vmatprep.subr.bf16.mxu0 0
  %318 = vmatpush2.bf16.msra.mxu0 0
  %319 = vmatprep.subr.bf16.mxu0 0
  %320 = vmatpush2.bf16.msra.mxu0 0
  %321 = vmatprep.subr.bf16.mxu0 0
  %322 = vmatpush2.bf16.msra.mxu0 0
  %323 = vmatprep.subr.bf16.mxu0 0
  %324 = vmatpush2.bf16.msra.mxu0 0
  %325 = vmatprep.subr.bf16.mxu0 0
  %326 = vmatpush2.bf16.msra.mxu0 0
  %327 = vmatprep.subr.bf16.mxu0 0
  %328 = vmatpush2.bf16.msra.mxu0 0
  %329 = vmatprep.mubr.bf16.mxu0 0
  %330 = vmatmul.mubr.bf16.gmra.mxu0 %v93
  %v331 = vpop.f32.mrf.mxu0
  %v332 = vadd.f32 0.0, %v331
  %v333 = vpop.f32.mrf.mxu0
  %v334 = vadd.f32 0.0, %v333
  %v335 = vpop.f32.mrf.mxu0
  %v336 = vadd.f32 0.0, %v335
  %v337 = vpop.f32.mrf.mxu0
  %v338 = vadd.f32 0.0, %v337
  %339 = vdwg.mxu0
  %v340 = vadd.f32 %v26, %v289
  %v341 = vadd.f32 %v27, %v291
  %v342 = vadd.f32 %v28, %v332
  %v343 = vadd.f32 %v29, %v334
  %v344 = vadd.f32 %v30, %v293
  %v345 = vadd.f32 %v31, %v295
  %v346 = vadd.f32 %v32, %v336
  %v347 = vadd.f32 %v33, %v338
  %v348 = vmul.f32 %v340, 0.5
  %v349 = vmul.f32 %v344, 0.5
  %v350 = vtanh.pop %v348
  %v351 = vtanh.pop %v349
  %v352 = vmul.f32 %v350, 0.5
  %v353 = vmul.f32 %v351, 0.5
  %v354 = vadd.f32 %v352, 0.5
  %v355 = vadd.f32 %v353, 0.5
  %v356 = vmul.f32 %v341, 0.5
  %v357 = vmul.f32 %v345, 0.5
  %v358 = vtanh.pop %v356
  %v359 = vtanh.pop %v357
  %v360 = vmul.f32 %v358, 0.5
  %v361 = vmul.f32 %v359, 0.5
  %v362 = vadd.f32 %v360, 0.5
  %v363 = vadd.f32 %v361, 0.5
  %v364 = vtanh.pop %v342
  %v365 = vtanh.pop %v346
  %v366 = vmul.f32 %v343, 0.5
  %v367 = vmul.f32 %v347, 0.5
  %v368 = vtanh.pop %v366
  %v369 = vtanh.pop %v367
  %v370 = vmul.f32 %v368, 0.5
  %v371 = vmul.f32 %v369, 0.5
  %v372 = vadd.f32 %v370, 0.5
  %v373 = vadd.f32 %v371, 0.5
  %v374 = vmul.f32 %v362, %v91
  %v375 = vmul.f32 %v363, %v92
  %v376 = vmul.f32 %v354, %v364
  %v377 = vmul.f32 %v355, %v365
  %v378 = vadd.f32 %v374, %v376
  %v379 = vadd.f32 %v375, %v377
  %v380 = vtanh.pop %v378
  %v381 = vtanh.pop %v379
  %v382 = vmul.f32 %v372, %v380
  %v383 = vmul.f32 %v373, %v381
  %v384 = vpack.c.bf16 %v383, %v382
  %v401 = vunpack.c.l.b16 %v66
  %v402 = vunpack.c.l.b16 %v67
  %v403 = vunpack.c.l.b16 %v68
  %v404 = vunpack.c.l.b16 %v69
  %v405 = vunpack.c.l.b16 %v70
  %v406 = vunpack.c.l.b16 %v71
  %v407 = vunpack.c.l.b16 %v72
  %v408 = vunpack.c.l.b16 %v73
  %v409 = vunpack.c.l.b16 %v74
  %v410 = vunpack.c.l.b16 %v75
  %v411 = vunpack.c.l.b16 %v76
  %v412 = vunpack.c.l.b16 %v77
  %v413 = vunpack.c.l.b16 %v78
  %v414 = vunpack.c.l.b16 %v79
  %v415 = vunpack.c.l.b16 %v80
  %v416 = vunpack.c.l.b16 %v81
  %v417 = vpack.c.b16 %v402, %v401
  %v418 = vpack.c.b16 %v404, %v403
  %v419 = vpack.c.b16 %v406, %v405
  %v420 = vpack.c.b16 %v408, %v407
  %v421 = vpack.c.b16 %v410, %v409
  %v422 = vpack.c.b16 %v412, %v411
  %v423 = vpack.c.b16 %v414, %v413
  %v424 = vpack.c.b16 %v416, %v415
  %433 = vmatprep.subr.bf16.mxu0 0
  %434 = vmatpush1.bf16.msra.mxu0 %v424
  %435 = vmatprep.subr.bf16.mxu0 0
  %436 = vmatpush1.bf16.msra.mxu0 %v423
  %437 = vmatprep.subr.bf16.mxu0 0
  %438 = vmatpush1.bf16.msra.mxu0 %v422
  %439 = vmatprep.subr.bf16.mxu0 0
  %440 = vmatpush1.bf16.msra.mxu0 %v421
  %441 = vmatprep.subr.bf16.mxu0 0
  %442 = vmatpush1.bf16.msra.mxu0 %v420
  %443 = vmatprep.subr.bf16.mxu0 0
  %444 = vmatpush1.bf16.msra.mxu0 %v419
  %445 = vmatprep.subr.bf16.mxu0 0
  %446 = vmatpush1.bf16.msra.mxu0 %v418
  %447 = vmatprep.subr.bf16.mxu0 0
  %448 = vmatpush1.bf16.msra.mxu0 %v417
  %449 = vmatprep.subr.bf16.mxu0 0
  %450 = vmatpush2.bf16.msra.mxu0 0
  %451 = vmatprep.subr.bf16.mxu0 0
  %452 = vmatpush2.bf16.msra.mxu0 0
  %453 = vmatprep.subr.bf16.mxu0 0
  %454 = vmatpush2.bf16.msra.mxu0 0
  %455 = vmatprep.subr.bf16.mxu0 0
  %456 = vmatpush2.bf16.msra.mxu0 0
  %457 = vmatprep.subr.bf16.mxu0 0
  %458 = vmatpush2.bf16.msra.mxu0 0
  %459 = vmatprep.subr.bf16.mxu0 0
  %460 = vmatpush2.bf16.msra.mxu0 0
  %461 = vmatprep.subr.bf16.mxu0 0
  %462 = vmatpush2.bf16.msra.mxu0 0
  %463 = vmatprep.subr.bf16.mxu0 0
  %464 = vmatpush2.bf16.msra.mxu0 0
  %465 = vmatprep.mubr.bf16.mxu0 0
  %466 = vmatmul.mubr.bf16.gmra.mxu0 %v384
  %v467 = vpop.f32.mrf.mxu0
  %v468 = vadd.f32 %v87, %v467
  %v469 = vpop.f32.mrf.mxu0
  %v470 = vpop.f32.mrf.mxu0
  %v471 = vadd.f32 %v87, %v470
  %v472 = vpop.f32.mrf.mxu0
  %473 = vdwg.mxu0
  %vm474 = vcmask 130048
  %475 = vst.msk [vmem:[%s4] sm:$0xff] %vm474, %v468
  %476 = vst.msk [vmem:[%s4 + $0x8] sm:$0xff] %vm474, %v471
  %477 = vmatprep.subr.bf16.mxu0 %v219
  %478 = vmatpush1.bf16.msra.mxu0 %v218
  %479 = vmatprep.subr.bf16.mxu0 %v215
  %480 = vmatpush1.bf16.msra.mxu0 %v214
  %481 = vmatprep.subr.bf16.mxu0 %v211
  %482 = vmatpush1.bf16.msra.mxu0 %v210
  %483 = vmatprep.subr.bf16.mxu0 %v207
  %484 = vmatpush1.bf16.msra.mxu0 %v206
  %485 = vmatprep.subr.bf16.mxu0 %v203
  %486 = vmatpush1.bf16.msra.mxu0 %v202
  %487 = vmatprep.subr.bf16.mxu0 %v199
  %488 = vmatpush1.bf16.msra.mxu0 %v198
  %489 = vmatprep.subr.bf16.mxu0 %v195
  %490 = vmatpush1.bf16.msra.mxu0 %v194
  %491 = vmatprep.subr.bf16.mxu0 %v191
  %492 = vmatpush1.bf16.msra.mxu0 %v190
  %493 = vmatprep.subr.bf16.mxu0 0
  %494 = vmatpush2.bf16.msra.mxu0 0
  %495 = vmatprep.subr.bf16.mxu0 0
  %496 = vmatpush2.bf16.msra.mxu0 0
  %497 = vmatprep.subr.bf16.mxu0 0
  %498 = vmatpush2.bf16.msra.mxu0 0
  %499 = vmatprep.subr.bf16.mxu0 0
  %500 = vmatpush2.bf16.msra.mxu0 0
  %501 = vmatprep.subr.bf16.mxu0 0
  %502 = vmatpush2.bf16.msra.mxu0 0
  %503 = vmatprep.subr.bf16.mxu0 0
  %504 = vmatpush2.bf16.msra.mxu0 0
  %505 = vmatprep.subr.bf16.mxu0 0
  %506 = vmatpush2.bf16.msra.mxu0 0
  %507 = vmatprep.subr.bf16.mxu0 0
  %508 = vmatpush2.bf16.msra.mxu0 0
  %509 = vmatprep.mubr.bf16.mxu0 0
  %510 = vmatmul.mubr.bf16.gmra.mxu0 %v384
  %v511 = vpop.f32.mrf.mxu0
  %v512 = vadd.f32 0.0, %v511
  %v513 = vpop.f32.mrf.mxu0
  %v514 = vadd.f32 0.0, %v513
  %v515 = vpop.f32.mrf.mxu0
  %v516 = vadd.f32 0.0, %v515
  %v517 = vpop.f32.mrf.mxu0
  %v518 = vadd.f32 0.0, %v517
  %519 = vdwg.mxu0
  %520 = vmatprep.subr.bf16.mxu0 %v221
  %521 = vmatpush1.bf16.msra.mxu0 %v220
  %522 = vmatprep.subr.bf16.mxu0 %v217
  %523 = vmatpush1.bf16.msra.mxu0 %v216
  %524 = vmatprep.subr.bf16.mxu0 %v213
  %525 = vmatpush1.bf16.msra.mxu0 %v212
  %526 = vmatprep.subr.bf16.mxu0 %v209
  %527 = vmatpush1.bf16.msra.mxu0 %v208
  %528 = vmatprep.subr.bf16.mxu0 %v205
  %529 = vmatpush1.bf16.msra.mxu0 %v204
  %530 = vmatprep.subr.bf16.mxu0 %v201
  %531 = vmatpush1.bf16.msra.mxu0 %v200
  %532 = vmatprep.subr.bf16.mxu0 %v197
  %533 = vmatpush1.bf16.msra.mxu0 %v196
  %534 = vmatprep.subr.bf16.mxu0 %v193
  %535 = vmatpush1.bf16.msra.mxu0 %v192
  %536 = vmatprep.subr.bf16.mxu0 0
  %537 = vmatpush2.bf16.msra.mxu0 0
  %538 = vmatprep.subr.bf16.mxu0 0
  %539 = vmatpush2.bf16.msra.mxu0 0
  %540 = vmatprep.subr.bf16.mxu0 0
  %541 = vmatpush2.bf16.msra.mxu0 0
  %542 = vmatprep.subr.bf16.mxu0 0
  %543 = vmatpush2.bf16.msra.mxu0 0
  %544 = vmatprep.subr.bf16.mxu0 0
  %545 = vmatpush2.bf16.msra.mxu0 0
  %546 = vmatprep.subr.bf16.mxu0 0
  %547 = vmatpush2.bf16.msra.mxu0 0
  %548 = vmatprep.subr.bf16.mxu0 0
  %549 = vmatpush2.bf16.msra.mxu0 0
  %550 = vmatprep.subr.bf16.mxu0 0
  %551 = vmatpush2.bf16.msra.mxu0 0
  %552 = vmatprep.mubr.bf16.mxu0 0
  %553 = vmatmul.mubr.bf16.gmra.mxu0 %v384
  %v554 = vpop.f32.mrf.mxu0
  %v555 = vadd.f32 0.0, %v554
  %v556 = vpop.f32.mrf.mxu0
  %v557 = vadd.f32 0.0, %v556
  %v558 = vpop.f32.mrf.mxu0
  %v559 = vadd.f32 0.0, %v558
  %v560 = vpop.f32.mrf.mxu0
  %v561 = vadd.f32 0.0, %v560
  %562 = vdwg.mxu0
  %v563 = vadd.f32 %v26, %v512
  %v564 = vadd.f32 %v27, %v514
  %v565 = vadd.f32 %v28, %v555
  %v566 = vadd.f32 %v29, %v557
  %v567 = vadd.f32 %v30, %v516
  %v568 = vadd.f32 %v31, %v518
  %v569 = vadd.f32 %v32, %v559
  %v570 = vadd.f32 %v33, %v561
  %v571 = vmul.f32 %v563, 0.5
  %v572 = vmul.f32 %v567, 0.5
  %v573 = vtanh.pop %v571
  %v574 = vtanh.pop %v572
  %v575 = vmul.f32 %v573, 0.5
  %v576 = vmul.f32 %v574, 0.5
  %v577 = vadd.f32 %v575, 0.5
  %v578 = vadd.f32 %v576, 0.5
  %v579 = vmul.f32 %v564, 0.5
  %v580 = vmul.f32 %v568, 0.5
  %v581 = vtanh.pop %v579
  %v582 = vtanh.pop %v580
  %v583 = vmul.f32 %v581, 0.5
  %v584 = vmul.f32 %v582, 0.5
  %v585 = vadd.f32 %v583, 0.5
  %v586 = vadd.f32 %v584, 0.5
  %v587 = vtanh.pop %v565
  %v588 = vtanh.pop %v569
  %v589 = vmul.f32 %v566, 0.5
  %v590 = vmul.f32 %v570, 0.5
  %v591 = vtanh.pop %v589
  %v592 = vtanh.pop %v590
  %v593 = vmul.f32 %v591, 0.5
  %v594 = vmul.f32 %v592, 0.5
  %v595 = vadd.f32 %v593, 0.5
  %v596 = vadd.f32 %v594, 0.5
  %v597 = vmul.f32 %v585, %v378
  %v598 = vmul.f32 %v586, %v379
  %v599 = vmul.f32 %v577, %v587
  %v600 = vmul.f32 %v578, %v588
  %v601 = vadd.f32 %v597, %v599
  %v602 = vadd.f32 %v598, %v600
  %v603 = vtanh.pop %v601
  %v604 = vtanh.pop %v602
  %v605 = vmul.f32 %v595, %v603
  %v606 = vmul.f32 %v596, %v604
  %v607 = vpack.c.bf16 %v606, %v605
  %608 = vmatprep.subr.bf16.mxu0 0
  %609 = vmatpush1.bf16.msra.mxu0 %v424
  %610 = vmatprep.subr.bf16.mxu0 0
  %611 = vmatpush1.bf16.msra.mxu0 %v423
  %612 = vmatprep.subr.bf16.mxu0 0
  %613 = vmatpush1.bf16.msra.mxu0 %v422
  %614 = vmatprep.subr.bf16.mxu0 0
  %615 = vmatpush1.bf16.msra.mxu0 %v421
  %616 = vmatprep.subr.bf16.mxu0 0
  %617 = vmatpush1.bf16.msra.mxu0 %v420
  %618 = vmatprep.subr.bf16.mxu0 0
  %619 = vmatpush1.bf16.msra.mxu0 %v419
  %620 = vmatprep.subr.bf16.mxu0 0
  %621 = vmatpush1.bf16.msra.mxu0 %v418
  %622 = vmatprep.subr.bf16.mxu0 0
  %623 = vmatpush1.bf16.msra.mxu0 %v417
  %624 = vmatprep.subr.bf16.mxu0 0
  %625 = vmatpush2.bf16.msra.mxu0 0
  %626 = vmatprep.subr.bf16.mxu0 0
  %627 = vmatpush2.bf16.msra.mxu0 0
  %628 = vmatprep.subr.bf16.mxu0 0
  %629 = vmatpush2.bf16.msra.mxu0 0
  %630 = vmatprep.subr.bf16.mxu0 0
  %631 = vmatpush2.bf16.msra.mxu0 0
  %632 = vmatprep.subr.bf16.mxu0 0
  %633 = vmatpush2.bf16.msra.mxu0 0
  %634 = vmatprep.subr.bf16.mxu0 0
  %635 = vmatpush2.bf16.msra.mxu0 0
  %636 = vmatprep.subr.bf16.mxu0 0
  %637 = vmatpush2.bf16.msra.mxu0 0
  %638 = vmatprep.subr.bf16.mxu0 0
  %639 = vmatpush2.bf16.msra.mxu0 0
  %640 = vmatprep.mubr.bf16.mxu0 0
  %641 = vmatmul.mubr.bf16.gmra.mxu0 %v607
  %v642 = vpop.f32.mrf.mxu0
  %v643 = vadd.f32 %v87, %v642
  %v644 = vpop.f32.mrf.mxu0
  %v645 = vpop.f32.mrf.mxu0
  %v646 = vadd.f32 %v87, %v645
  %v647 = vpop.f32.mrf.mxu0
  %648 = vdwg.mxu0
  %651 = vrot.lane.b32.xlu0 %v643, 16
  %v652 = vpop.permute.xlu0 %651
  %653 = vrot.lane.b32.xlu0 %v646, 16
  %v654 = vpop.permute.xlu0 %653
  %vm657 = vcmask 261248
  %658 = vst.msk [vmem:[%s4] sm:$0xff] %vm657, %v652
  %659 = vst.msk [vmem:[%s4 + $0x8] sm:$0xff] %vm657, %v654
  %660 = vmatprep.subr.bf16.mxu0 %v219
  %661 = vmatpush1.bf16.msra.mxu0 %v218
  %662 = vmatprep.subr.bf16.mxu0 %v215
  %663 = vmatpush1.bf16.msra.mxu0 %v214
  %664 = vmatprep.subr.bf16.mxu0 %v211
  %665 = vmatpush1.bf16.msra.mxu0 %v210
  %666 = vmatprep.subr.bf16.mxu0 %v207
  %667 = vmatpush1.bf16.msra.mxu0 %v206
  %668 = vmatprep.subr.bf16.mxu0 %v203
  %669 = vmatpush1.bf16.msra.mxu0 %v202
  %670 = vmatprep.subr.bf16.mxu0 %v199
  %671 = vmatpush1.bf16.msra.mxu0 %v198
  %672 = vmatprep.subr.bf16.mxu0 %v195
  %673 = vmatpush1.bf16.msra.mxu0 %v194
  %674 = vmatprep.subr.bf16.mxu0 %v191
  %675 = vmatpush1.bf16.msra.mxu0 %v190
  %676 = vmatprep.subr.bf16.mxu0 0
  %677 = vmatpush2.bf16.msra.mxu0 0
  %678 = vmatprep.subr.bf16.mxu0 0
  %679 = vmatpush2.bf16.msra.mxu0 0
  %680 = vmatprep.subr.bf16.mxu0 0
  %681 = vmatpush2.bf16.msra.mxu0 0
  %682 = vmatprep.subr.bf16.mxu0 0
  %683 = vmatpush2.bf16.msra.mxu0 0
  %684 = vmatprep.subr.bf16.mxu0 0
  %685 = vmatpush2.bf16.msra.mxu0 0
  %686 = vmatprep.subr.bf16.mxu0 0
  %687 = vmatpush2.bf16.msra.mxu0 0
  %688 = vmatprep.subr.bf16.mxu0 0
  %689 = vmatpush2.bf16.msra.mxu0 0
  %690 = vmatprep.subr.bf16.mxu0 0
  %691 = vmatpush2.bf16.msra.mxu0 0
  %692 = vmatprep.mubr.bf16.mxu0 0
  %693 = vmatmul.mubr.bf16.gmra.mxu0 %v607
  %v694 = vpop.f32.mrf.mxu0
  %v695 = vadd.f32 0.0, %v694
  %v696 = vpop.f32.mrf.mxu0
  %v697 = vadd.f32 0.0, %v696
  %v698 = vpop.f32.mrf.mxu0
  %v699 = vadd.f32 0.0, %v698
  %v700 = vpop.f32.mrf.mxu0
  %v701 = vadd.f32 0.0, %v700
  %702 = vdwg.mxu0
  %703 = vmatprep.subr.bf16.mxu0 %v221
  %704 = vmatpush1.bf16.msra.mxu0 %v220
  %705 = vmatprep.subr.bf16.mxu0 %v217
  %706 = vmatpush1.bf16.msra.mxu0 %v216
  %707 = vmatprep.subr.bf16.mxu0 %v213
  %708 = vmatpush1.bf16.msra.mxu0 %v212
  %709 = vmatprep.subr.bf16.mxu0 %v209
  %710 = vmatpush1.bf16.msra.mxu0 %v208
  %711 = vmatprep.subr.bf16.mxu0 %v205
  %712 = vmatpush1.bf16.msra.mxu0 %v204
  %713 = vmatprep.subr.bf16.mxu0 %v201
  %714 = vmatpush1.bf16.msra.mxu0 %v200
  %715 = vmatprep.subr.bf16.mxu0 %v197
  %716 = vmatpush1.bf16.msra.mxu0 %v196
  %717 = vmatprep.subr.bf16.mxu0 %v193
  %718 = vmatpush1.bf16.msra.mxu0 %v192
  %719 = vmatprep.subr.bf16.mxu0 0
  %720 = vmatpush2.bf16.msra.mxu0 0
  %721 = vmatprep.subr.bf16.mxu0 0
  %722 = vmatpush2.bf16.msra.mxu0 0
  %723 = vmatprep.subr.bf16.mxu0 0
  %724 = vmatpush2.bf16.msra.mxu0 0
  %725 = vmatprep.subr.bf16.mxu0 0
  %726 = vmatpush2.bf16.msra.mxu0 0
  %727 = vmatprep.subr.bf16.mxu0 0
  %728 = vmatpush2.bf16.msra.mxu0 0
  %729 = vmatprep.subr.bf16.mxu0 0
  %730 = vmatpush2.bf16.msra.mxu0 0
  %731 = vmatprep.subr.bf16.mxu0 0
  %732 = vmatpush2.bf16.msra.mxu0 0
  %733 = vmatprep.subr.bf16.mxu0 0
  %734 = vmatpush2.bf16.msra.mxu0 0
  %735 = vmatprep.mubr.bf16.mxu0 0
  %736 = vmatmul.mubr.bf16.gmra.mxu0 %v607
  %v737 = vpop.f32.mrf.mxu0
  %v738 = vadd.f32 0.0, %v737
  %v739 = vpop.f32.mrf.mxu0
  %v740 = vadd.f32 0.0, %v739
  %v741 = vpop.f32.mrf.mxu0
  %v742 = vadd.f32 0.0, %v741
  %v743 = vpop.f32.mrf.mxu0
  %v744 = vadd.f32 0.0, %v743
  %745 = vdwg.mxu0
  %v746 = vadd.f32 %v26, %v695
  %v747 = vadd.f32 %v27, %v697
  %v748 = vadd.f32 %v28, %v738
  %v749 = vadd.f32 %v29, %v740
  %v750 = vadd.f32 %v30, %v699
  %v751 = vadd.f32 %v31, %v701
  %v752 = vadd.f32 %v32, %v742
  %v753 = vadd.f32 %v33, %v744
  %v754 = vmul.f32 %v746, 0.5
  %v755 = vmul.f32 %v750, 0.5
  %v756 = vtanh.pop %v754
  %v757 = vtanh.pop %v755
  %v758 = vmul.f32 %v756, 0.5
  %v759 = vmul.f32 %v757, 0.5
  %v760 = vadd.f32 %v758, 0.5
  %v761 = vadd.f32 %v759, 0.5
  %v762 = vmul.f32 %v747, 0.5
  %v763 = vmul.f32 %v751, 0.5
  %v764 = vtanh.pop %v762
  %v765 = vtanh.pop %v763
  %v766 = vmul.f32 %v764, 0.5
  %v767 = vmul.f32 %v765, 0.5
  %v768 = vadd.f32 %v766, 0.5
  %v769 = vadd.f32 %v767, 0.5
  %v770 = vtanh.pop %v748
  %v771 = vtanh.pop %v752
  %v772 = vmul.f32 %v749, 0.5
  %v773 = vmul.f32 %v753, 0.5
  %v774 = vtanh.pop %v772
  %v775 = vtanh.pop %v773
  %v776 = vmul.f32 %v774, 0.5
  %v777 = vmul.f32 %v775, 0.5
  %v778 = vadd.f32 %v776, 0.5
  %v779 = vadd.f32 %v777, 0.5
  %v780 = vmul.f32 %v768, %v601
  %v781 = vmul.f32 %v769, %v602
  %v782 = vmul.f32 %v760, %v770
  %v783 = vmul.f32 %v761, %v771
  %v784 = vadd.f32 %v780, %v782
  %v785 = vadd.f32 %v781, %v783
  %v786 = vtanh.pop %v784
  %v787 = vtanh.pop %v785
  %v788 = vmul.f32 %v778, %v786
  %v789 = vmul.f32 %v779, %v787
  %v790 = vpack.c.bf16 %v789, %v788
  %791 = vmatprep.subr.bf16.mxu0 0
  %792 = vmatpush1.bf16.msra.mxu0 %v424
  %793 = vmatprep.subr.bf16.mxu0 0
  %794 = vmatpush1.bf16.msra.mxu0 %v423
  %795 = vmatprep.subr.bf16.mxu0 0
  %796 = vmatpush1.bf16.msra.mxu0 %v422
  %797 = vmatprep.subr.bf16.mxu0 0
  %798 = vmatpush1.bf16.msra.mxu0 %v421
  %799 = vmatprep.subr.bf16.mxu0 0
  %800 = vmatpush1.bf16.msra.mxu0 %v420
  %801 = vmatprep.subr.bf16.mxu0 0
  %802 = vmatpush1.bf16.msra.mxu0 %v419
  %803 = vmatprep.subr.bf16.mxu0 0
  %804 = vmatpush1.bf16.msra.mxu0 %v418
  %805 = vmatprep.subr.bf16.mxu0 0
  %806 = vmatpush1.bf16.msra.mxu0 %v417
  %807 = vmatprep.subr.bf16.mxu0 0
  %808 = vmatpush2.bf16.msra.mxu0 0
  %809 = vmatprep.subr.bf16.mxu0 0
  %810 = vmatpush2.bf16.msra.mxu0 0
  %811 = vmatprep.subr.bf16.mxu0 0
  %812 = vmatpush2.bf16.msra.mxu0 0
  %813 = vmatprep.subr.bf16.mxu0 0
  %814 = vmatpush2.bf16.msra.mxu0 0
  %815 = vmatprep.subr.bf16.mxu0 0
  %816 = vmatpush2.bf16.msra.mxu0 0
  %817 = vmatprep.subr.bf16.mxu0 0
  %818 = vmatpush2.bf16.msra.mxu0 0
  %819 = vmatprep.subr.bf16.mxu0 0
  %820 = vmatpush2.bf16.msra.mxu0 0
  %821 = vmatprep.subr.bf16.mxu0 0
  %822 = vmatpush2.bf16.msra.mxu0 0
  %823 = vmatprep.mubr.bf16.mxu0 0
  %824 = vmatmul.mubr.bf16.gmra.mxu0 %v790
  %v825 = vpop.f32.mrf.mxu0
  %v826 = vadd.f32 %v87, %v825
  %v827 = vpop.f32.mrf.mxu0
  %v828 = vpop.f32.mrf.mxu0
  %v829 = vadd.f32 %v87, %v828
  %v830 = vpop.f32.mrf.mxu0
  %831 = vdwg.mxu0
  %834 = vrot.lane.b32.xlu0 %v826, 32
  %v835 = vpop.permute.xlu0 %834
  %836 = vrot.lane.b32.xlu0 %v829, 32
  %v837 = vpop.permute.xlu0 %836
  %vm840 = vcmask 392448
  %841 = vst.msk [vmem:[%s4] sm:$0xff] %vm840, %v835
  %842 = vst.msk [vmem:[%s4 + $0x8] sm:$0xff] %vm840, %v837
  %843 = vmatprep.subr.bf16.mxu0 %v219
  %844 = vmatpush1.bf16.msra.mxu0 %v218
  %845 = vmatprep.subr.bf16.mxu0 %v215
  %846 = vmatpush1.bf16.msra.mxu0 %v214
  %847 = vmatprep.subr.bf16.mxu0 %v211
  %848 = vmatpush1.bf16.msra.mxu0 %v210
  %849 = vmatprep.subr.bf16.mxu0 %v207
  %850 = vmatpush1.bf16.msra.mxu0 %v206
  %851 = vmatprep.subr.bf16.mxu0 %v203
  %852 = vmatpush1.bf16.msra.mxu0 %v202
  %853 = vmatprep.subr.bf16.mxu0 %v199
  %854 = vmatpush1.bf16.msra.mxu0 %v198
  %855 = vmatprep.subr.bf16.mxu0 %v195
  %856 = vmatpush1.bf16.msra.mxu0 %v194
  %857 = vmatprep.subr.bf16.mxu0 %v191
  %858 = vmatpush1.bf16.msra.mxu0 %v190
  %859 = vmatprep.subr.bf16.mxu0 0
  %860 = vmatpush2.bf16.msra.mxu0 0
  %861 = vmatprep.subr.bf16.mxu0 0
  %862 = vmatpush2.bf16.msra.mxu0 0
  %863 = vmatprep.subr.bf16.mxu0 0
  %864 = vmatpush2.bf16.msra.mxu0 0
  %865 = vmatprep.subr.bf16.mxu0 0
  %866 = vmatpush2.bf16.msra.mxu0 0
  %867 = vmatprep.subr.bf16.mxu0 0
  %868 = vmatpush2.bf16.msra.mxu0 0
  %869 = vmatprep.subr.bf16.mxu0 0
  %870 = vmatpush2.bf16.msra.mxu0 0
  %871 = vmatprep.subr.bf16.mxu0 0
  %872 = vmatpush2.bf16.msra.mxu0 0
  %873 = vmatprep.subr.bf16.mxu0 0
  %874 = vmatpush2.bf16.msra.mxu0 0
  %875 = vmatprep.mubr.bf16.mxu0 0
  %876 = vmatmul.mubr.bf16.gmra.mxu0 %v790
  %v877 = vpop.f32.mrf.mxu0
  %v878 = vadd.f32 0.0, %v877
  %v879 = vpop.f32.mrf.mxu0
  %v880 = vadd.f32 0.0, %v879
  %v881 = vpop.f32.mrf.mxu0
  %v882 = vadd.f32 0.0, %v881
  %v883 = vpop.f32.mrf.mxu0
  %v884 = vadd.f32 0.0, %v883
  %885 = vdwg.mxu0
  %886 = vmatprep.subr.bf16.mxu0 %v221
  %887 = vmatpush1.bf16.msra.mxu0 %v220
  %888 = vmatprep.subr.bf16.mxu0 %v217
  %889 = vmatpush1.bf16.msra.mxu0 %v216
  %890 = vmatprep.subr.bf16.mxu0 %v213
  %891 = vmatpush1.bf16.msra.mxu0 %v212
  %892 = vmatprep.subr.bf16.mxu0 %v209
  %893 = vmatpush1.bf16.msra.mxu0 %v208
  %894 = vmatprep.subr.bf16.mxu0 %v205
  %895 = vmatpush1.bf16.msra.mxu0 %v204
  %896 = vmatprep.subr.bf16.mxu0 %v201
  %897 = vmatpush1.bf16.msra.mxu0 %v200
  %898 = vmatprep.subr.bf16.mxu0 %v197
  %899 = vmatpush1.bf16.msra.mxu0 %v196
  %900 = vmatprep.subr.bf16.mxu0 %v193
  %901 = vmatpush1.bf16.msra.mxu0 %v192
  %902 = vmatprep.subr.bf16.mxu0 0
  %903 = vmatpush2.bf16.msra.mxu0 0
  %904 = vmatprep.subr.bf16.mxu0 0
  %905 = vmatpush2.bf16.msra.mxu0 0
  %906 = vmatprep.subr.bf16.mxu0 0
  %907 = vmatpush2.bf16.msra.mxu0 0
  %908 = vmatprep.subr.bf16.mxu0 0
  %909 = vmatpush2.bf16.msra.mxu0 0
  %910 = vmatprep.subr.bf16.mxu0 0
  %911 = vmatpush2.bf16.msra.mxu0 0
  %912 = vmatprep.subr.bf16.mxu0 0
  %913 = vmatpush2.bf16.msra.mxu0 0
  %914 = vmatprep.subr.bf16.mxu0 0
  %915 = vmatpush2.bf16.msra.mxu0 0
  %916 = vmatprep.subr.bf16.mxu0 0
  %917 = vmatpush2.bf16.msra.mxu0 0
  %918 = vmatprep.mubr.bf16.mxu0 0
  %919 = vmatmul.mubr.bf16.gmra.mxu0 %v790
  %v920 = vpop.f32.mrf.mxu0
  %v921 = vadd.f32 0.0, %v920
  %v922 = vpop.f32.mrf.mxu0
  %v923 = vadd.f32 0.0, %v922
  %v924 = vpop.f32.mrf.mxu0
  %v925 = vadd.f32 0.0, %v924
  %v926 = vpop.f32.mrf.mxu0
  %v927 = vadd.f32 0.0, %v926
  %928 = vdwg.mxu0
  %v929 = vadd.f32 %v26, %v878
  %v930 = vadd.f32 %v27, %v880
  %v931 = vadd.f32 %v28, %v921
  %v932 = vadd.f32 %v29, %v923
  %v933 = vadd.f32 %v30, %v882
  %v934 = vadd.f32 %v31, %v884
  %v935 = vadd.f32 %v32, %v925
  %v936 = vadd.f32 %v33, %v927
  %v937 = vmul.f32 %v929, 0.5
  %v938 = vmul.f32 %v933, 0.5
  %v939 = vtanh.pop %v937
  %v940 = vtanh.pop %v938
  %v941 = vmul.f32 %v939, 0.5
  %v942 = vmul.f32 %v940, 0.5
  %v943 = vadd.f32 %v941, 0.5
  %v944 = vadd.f32 %v942, 0.5
  %v945 = vmul.f32 %v930, 0.5
  %v946 = vmul.f32 %v934, 0.5
  %v947 = vtanh.pop %v945
  %v948 = vtanh.pop %v946
  %v949 = vmul.f32 %v947, 0.5
  %v950 = vmul.f32 %v948, 0.5
  %v951 = vadd.f32 %v949, 0.5
  %v952 = vadd.f32 %v950, 0.5
  %v953 = vtanh.pop %v931
  %v954 = vtanh.pop %v935
  %v955 = vmul.f32 %v932, 0.5
  %v956 = vmul.f32 %v936, 0.5
  %v957 = vtanh.pop %v955
  %v958 = vtanh.pop %v956
  %v959 = vmul.f32 %v957, 0.5
  %v960 = vmul.f32 %v958, 0.5
  %v961 = vadd.f32 %v959, 0.5
  %v962 = vadd.f32 %v960, 0.5
  %v963 = vmul.f32 %v951, %v784
  %v964 = vmul.f32 %v952, %v785
  %v965 = vmul.f32 %v943, %v953
  %v966 = vmul.f32 %v944, %v954
  %v967 = vadd.f32 %v963, %v965
  %v968 = vadd.f32 %v964, %v966
  %v969 = vtanh.pop %v967
  %v970 = vtanh.pop %v968
  %v971 = vmul.f32 %v961, %v969
  %v972 = vmul.f32 %v962, %v970
  %v973 = vpack.c.bf16 %v972, %v971
  %974 = vmatprep.subr.bf16.mxu0 0
  %975 = vmatpush1.bf16.msra.mxu0 %v424
  %976 = vmatprep.subr.bf16.mxu0 0
  %977 = vmatpush1.bf16.msra.mxu0 %v423
  %978 = vmatprep.subr.bf16.mxu0 0
  %979 = vmatpush1.bf16.msra.mxu0 %v422
  %980 = vmatprep.subr.bf16.mxu0 0
  %981 = vmatpush1.bf16.msra.mxu0 %v421
  %982 = vmatprep.subr.bf16.mxu0 0
  %983 = vmatpush1.bf16.msra.mxu0 %v420
  %984 = vmatprep.subr.bf16.mxu0 0
  %985 = vmatpush1.bf16.msra.mxu0 %v419
  %986 = vmatprep.subr.bf16.mxu0 0
  %987 = vmatpush1.bf16.msra.mxu0 %v418
  %988 = vmatprep.subr.bf16.mxu0 0
  %989 = vmatpush1.bf16.msra.mxu0 %v417
  %990 = vmatprep.subr.bf16.mxu0 0
  %991 = vmatpush2.bf16.msra.mxu0 0
  %992 = vmatprep.subr.bf16.mxu0 0
  %993 = vmatpush2.bf16.msra.mxu0 0
  %994 = vmatprep.subr.bf16.mxu0 0
  %995 = vmatpush2.bf16.msra.mxu0 0
  %996 = vmatprep.subr.bf16.mxu0 0
  %997 = vmatpush2.bf16.msra.mxu0 0
  %998 = vmatprep.subr.bf16.mxu0 0
  %999 = vmatpush2.bf16.msra.mxu0 0
  %1000 = vmatprep.subr.bf16.mxu0 0
  %1001 = vmatpush2.bf16.msra.mxu0 0
  %1002 = vmatprep.subr.bf16.mxu0 0
  %1003 = vmatpush2.bf16.msra.mxu0 0
  %1004 = vmatprep.subr.bf16.mxu0 0
  %1005 = vmatpush2.bf16.msra.mxu0 0
  %1006 = vmatprep.mubr.bf16.mxu0 0
  %1007 = vmatmul.mubr.bf16.gmra.mxu0 %v973
  %v1008 = vpop.f32.mrf.mxu0
  %v1009 = vadd.f32 %v87, %v1008
  %v1010 = vpop.f32.mrf.mxu0
  %v1011 = vpop.f32.mrf.mxu0
  %v1012 = vadd.f32 %v87, %v1011
  %v1013 = vpop.f32.mrf.mxu0
  %1014 = vdwg.mxu0
  %1017 = vrot.lane.b32.xlu0 %v1009, 48
  %v1018 = vpop.permute.xlu0 %1017
  %1019 = vrot.lane.b32.xlu0 %v1012, 48
  %v1020 = vpop.permute.xlu0 %1019
  %vm1023 = vcmask 523648
  %1024 = vst.msk [vmem:[%s4] sm:$0xff] %vm1023, %v1018
  %1025 = vst.msk [vmem:[%s4 + $0x8] sm:$0xff] %vm1023, %v1020
  %1026 = vmatprep.subr.bf16.mxu0 %v219
  %1027 = vmatpush1.bf16.msra.mxu0 %v218
  %1028 = vmatprep.subr.bf16.mxu0 %v215
  %1029 = vmatpush1.bf16.msra.mxu0 %v214
  %1030 = vmatprep.subr.bf16.mxu0 %v211
  %1031 = vmatpush1.bf16.msra.mxu0 %v210
  %1032 = vmatprep.subr.bf16.mxu0 %v207
  %1033 = vmatpush1.bf16.msra.mxu0 %v206
  %1034 = vmatprep.subr.bf16.mxu0 %v203
  %1035 = vmatpush1.bf16.msra.mxu0 %v202
  %1036 = vmatprep.subr.bf16.mxu0 %v199
  %1037 = vmatpush1.bf16.msra.mxu0 %v198
  %1038 = vmatprep.subr.bf16.mxu0 %v195
  %1039 = vmatpush1.bf16.msra.mxu0 %v194
  %1040 = vmatprep.subr.bf16.mxu0 %v191
  %1041 = vmatpush1.bf16.msra.mxu0 %v190
  %1042 = vmatprep.subr.bf16.mxu0 0
  %1043 = vmatpush2.bf16.msra.mxu0 0
  %1044 = vmatprep.subr.bf16.mxu0 0
  %1045 = vmatpush2.bf16.msra.mxu0 0
  %1046 = vmatprep.subr.bf16.mxu0 0
  %1047 = vmatpush2.bf16.msra.mxu0 0
  %1048 = vmatprep.subr.bf16.mxu0 0
  %1049 = vmatpush2.bf16.msra.mxu0 0
  %1050 = vmatprep.subr.bf16.mxu0 0
  %1051 = vmatpush2.bf16.msra.mxu0 0
  %1052 = vmatprep.subr.bf16.mxu0 0
  %1053 = vmatpush2.bf16.msra.mxu0 0
  %1054 = vmatprep.subr.bf16.mxu0 0
  %1055 = vmatpush2.bf16.msra.mxu0 0
  %1056 = vmatprep.subr.bf16.mxu0 0
  %1057 = vmatpush2.bf16.msra.mxu0 0
  %1058 = vmatprep.mubr.bf16.mxu0 0
  %1059 = vmatmul.mubr.bf16.gmra.mxu0 %v973
  %v1060 = vpop.f32.mrf.mxu0
  %v1061 = vadd.f32 0.0, %v1060
  %v1062 = vpop.f32.mrf.mxu0
  %v1063 = vadd.f32 0.0, %v1062
  %v1064 = vpop.f32.mrf.mxu0
  %v1065 = vadd.f32 0.0, %v1064
  %v1066 = vpop.f32.mrf.mxu0
  %v1067 = vadd.f32 0.0, %v1066
  %1068 = vdwg.mxu0
  %1069 = vmatprep.subr.bf16.mxu0 %v221
  %1070 = vmatpush1.bf16.msra.mxu0 %v220
  %1071 = vmatprep.subr.bf16.mxu0 %v217
  %1072 = vmatpush1.bf16.msra.mxu0 %v216
  %1073 = vmatprep.subr.bf16.mxu0 %v213
  %1074 = vmatpush1.bf16.msra.mxu0 %v212
  %1075 = vmatprep.subr.bf16.mxu0 %v209
  %1076 = vmatpush1.bf16.msra.mxu0 %v208
  %1077 = vmatprep.subr.bf16.mxu0 %v205
  %1078 = vmatpush1.bf16.msra.mxu0 %v204
  %1079 = vmatprep.subr.bf16.mxu0 %v201
  %1080 = vmatpush1.bf16.msra.mxu0 %v200
  %1081 = vmatprep.subr.bf16.mxu0 %v197
  %1082 = vmatpush1.bf16.msra.mxu0 %v196
  %1083 = vmatprep.subr.bf16.mxu0 %v193
  %1084 = vmatpush1.bf16.msra.mxu0 %v192
  %1085 = vmatprep.subr.bf16.mxu0 0
  %1086 = vmatpush2.bf16.msra.mxu0 0
  %1087 = vmatprep.subr.bf16.mxu0 0
  %1088 = vmatpush2.bf16.msra.mxu0 0
  %1089 = vmatprep.subr.bf16.mxu0 0
  %1090 = vmatpush2.bf16.msra.mxu0 0
  %1091 = vmatprep.subr.bf16.mxu0 0
  %1092 = vmatpush2.bf16.msra.mxu0 0
  %1093 = vmatprep.subr.bf16.mxu0 0
  %1094 = vmatpush2.bf16.msra.mxu0 0
  %1095 = vmatprep.subr.bf16.mxu0 0
  %1096 = vmatpush2.bf16.msra.mxu0 0
  %1097 = vmatprep.subr.bf16.mxu0 0
  %1098 = vmatpush2.bf16.msra.mxu0 0
  %1099 = vmatprep.subr.bf16.mxu0 0
  %1100 = vmatpush2.bf16.msra.mxu0 0
  %1101 = vmatprep.mubr.bf16.mxu0 0
  %1102 = vmatmul.mubr.bf16.gmra.mxu0 %v973
  %v1103 = vpop.f32.mrf.mxu0
  %v1104 = vadd.f32 0.0, %v1103
  %v1105 = vpop.f32.mrf.mxu0
  %v1106 = vadd.f32 0.0, %v1105
  %v1107 = vpop.f32.mrf.mxu0
  %v1108 = vadd.f32 0.0, %v1107
  %v1109 = vpop.f32.mrf.mxu0
  %v1110 = vadd.f32 0.0, %v1109
  %1111 = vdwg.mxu0
  %v1112 = vadd.f32 %v26, %v1061
  %v1113 = vadd.f32 %v27, %v1063
  %v1114 = vadd.f32 %v28, %v1104
  %v1115 = vadd.f32 %v29, %v1106
  %v1116 = vadd.f32 %v30, %v1065
  %v1117 = vadd.f32 %v31, %v1067
  %v1118 = vadd.f32 %v32, %v1108
  %v1119 = vadd.f32 %v33, %v1110
  %v1120 = vmul.f32 %v1112, 0.5
  %v1121 = vmul.f32 %v1116, 0.5
  %v1122 = vtanh.pop %v1120
  %v1123 = vtanh.pop %v1121
  %v1124 = vmul.f32 %v1122, 0.5
  %v1125 = vmul.f32 %v1123, 0.5
  %v1126 = vadd.f32 %v1124, 0.5
  %v1127 = vadd.f32 %v1125, 0.5
  %v1128 = vmul.f32 %v1113, 0.5
  %v1129 = vmul.f32 %v1117, 0.5
  %v1130 = vtanh.pop %v1128
  %v1131 = vtanh.pop %v1129
  %v1132 = vmul.f32 %v1130, 0.5
  %v1133 = vmul.f32 %v1131, 0.5
  %v1134 = vadd.f32 %v1132, 0.5
  %v1135 = vadd.f32 %v1133, 0.5
  %v1136 = vtanh.pop %v1114
  %v1137 = vtanh.pop %v1118
  %v1138 = vmul.f32 %v1115, 0.5
  %v1139 = vmul.f32 %v1119, 0.5
  %v1140 = vtanh.pop %v1138
  %v1141 = vtanh.pop %v1139
  %v1142 = vmul.f32 %v1140, 0.5
  %v1143 = vmul.f32 %v1141, 0.5
  %v1144 = vadd.f32 %v1142, 0.5
  %v1145 = vadd.f32 %v1143, 0.5
  %v1146 = vmul.f32 %v1134, %v967
  %v1147 = vmul.f32 %v1135, %v968
  %v1148 = vmul.f32 %v1126, %v1136
  %v1149 = vmul.f32 %v1127, %v1137
  %v1150 = vadd.f32 %v1146, %v1148
  %v1151 = vadd.f32 %v1147, %v1149
  %v1152 = vtanh.pop %v1150
  %v1153 = vtanh.pop %v1151
  %v1154 = vmul.f32 %v1144, %v1152
  %v1155 = vmul.f32 %v1145, %v1153
  %v1156 = vpack.c.bf16 %v1155, %v1154
  %1157 = vmatprep.subr.bf16.mxu0 0
  %1158 = vmatpush1.bf16.msra.mxu0 %v424
  %1159 = vmatprep.subr.bf16.mxu0 0
  %1160 = vmatpush1.bf16.msra.mxu0 %v423
  %1161 = vmatprep.subr.bf16.mxu0 0
  %1162 = vmatpush1.bf16.msra.mxu0 %v422
  %1163 = vmatprep.subr.bf16.mxu0 0
  %1164 = vmatpush1.bf16.msra.mxu0 %v421
  %1165 = vmatprep.subr.bf16.mxu0 0
  %1166 = vmatpush1.bf16.msra.mxu0 %v420
  %1167 = vmatprep.subr.bf16.mxu0 0
  %1168 = vmatpush1.bf16.msra.mxu0 %v419
  %1169 = vmatprep.subr.bf16.mxu0 0
  %1170 = vmatpush1.bf16.msra.mxu0 %v418
  %1171 = vmatprep.subr.bf16.mxu0 0
  %1172 = vmatpush1.bf16.msra.mxu0 %v417
  %1173 = vmatprep.subr.bf16.mxu0 0
  %1174 = vmatpush2.bf16.msra.mxu0 0
  %1175 = vmatprep.subr.bf16.mxu0 0
  %1176 = vmatpush2.bf16.msra.mxu0 0
  %1177 = vmatprep.subr.bf16.mxu0 0
  %1178 = vmatpush2.bf16.msra.mxu0 0
  %1179 = vmatprep.subr.bf16.mxu0 0
  %1180 = vmatpush2.bf16.msra.mxu0 0
  %1181 = vmatprep.subr.bf16.mxu0 0
  %1182 = vmatpush2.bf16.msra.mxu0 0
  %1183 = vmatprep.subr.bf16.mxu0 0
  %1184 = vmatpush2.bf16.msra.mxu0 0
  %1185 = vmatprep.subr.bf16.mxu0 0
  %1186 = vmatpush2.bf16.msra.mxu0 0
  %1187 = vmatprep.subr.bf16.mxu0 0
  %1188 = vmatpush2.bf16.msra.mxu0 0
  %1189 = vmatprep.mubr.bf16.mxu0 0
  %1190 = vmatmul.mubr.bf16.gmra.mxu0 %v1156
  %v1191 = vpop.f32.mrf.mxu0
  %v1192 = vadd.f32 %v87, %v1191
  %v1193 = vpop.f32.mrf.mxu0
  %v1194 = vpop.f32.mrf.mxu0
  %v1195 = vadd.f32 %v87, %v1194
  %v1196 = vpop.f32.mrf.mxu0
  %1197 = vdwg.mxu0
  %1200 = vrot.lane.b32.xlu0 %v1192, 64
  %v1201 = vpop.permute.xlu0 %1200
  %1202 = vrot.lane.b32.xlu0 %v1195, 64
  %v1203 = vpop.permute.xlu0 %1202
  %vm1206 = vcmask 654848
  %1207 = vst.msk [vmem:[%s4] sm:$0xff] %vm1206, %v1201
  %1208 = vst.msk [vmem:[%s4 + $0x8] sm:$0xff] %vm1206, %v1203
  %1209 = vmatprep.subr.bf16.mxu0 %v219
  %1210 = vmatpush1.bf16.msra.mxu0 %v218
  %1211 = vmatprep.subr.bf16.mxu0 %v215
  %1212 = vmatpush1.bf16.msra.mxu0 %v214
  %1213 = vmatprep.subr.bf16.mxu0 %v211
  %1214 = vmatpush1.bf16.msra.mxu0 %v210
  %1215 = vmatprep.subr.bf16.mxu0 %v207
  %1216 = vmatpush1.bf16.msra.mxu0 %v206
  %1217 = vmatprep.subr.bf16.mxu0 %v203
  %1218 = vmatpush1.bf16.msra.mxu0 %v202
  %1219 = vmatprep.subr.bf16.mxu0 %v199
  %1220 = vmatpush1.bf16.msra.mxu0 %v198
  %1221 = vmatprep.subr.bf16.mxu0 %v195
  %1222 = vmatpush1.bf16.msra.mxu0 %v194
  %1223 = vmatprep.subr.bf16.mxu0 %v191
  %1224 = vmatpush1.bf16.msra.mxu0 %v190
  %1225 = vmatprep.subr.bf16.mxu0 0
  %1226 = vmatpush2.bf16.msra.mxu0 0
  %1227 = vmatprep.subr.bf16.mxu0 0
  %1228 = vmatpush2.bf16.msra.mxu0 0
  %1229 = vmatprep.subr.bf16.mxu0 0
  %1230 = vmatpush2.bf16.msra.mxu0 0
  %1231 = vmatprep.subr.bf16.mxu0 0
  %1232 = vmatpush2.bf16.msra.mxu0 0
  %1233 = vmatprep.subr.bf16.mxu0 0
  %1234 = vmatpush2.bf16.msra.mxu0 0
  %1235 = vmatprep.subr.bf16.mxu0 0
  %1236 = vmatpush2.bf16.msra.mxu0 0
  %1237 = vmatprep.subr.bf16.mxu0 0
  %1238 = vmatpush2.bf16.msra.mxu0 0
  %1239 = vmatprep.subr.bf16.mxu0 0
  %1240 = vmatpush2.bf16.msra.mxu0 0
  %1241 = vmatprep.mubr.bf16.mxu0 0
  %1242 = vmatmul.mubr.bf16.gmra.mxu0 %v1156
  %v1243 = vpop.f32.mrf.mxu0
  %v1244 = vadd.f32 0.0, %v1243
  %v1245 = vpop.f32.mrf.mxu0
  %v1246 = vadd.f32 0.0, %v1245
  %v1247 = vpop.f32.mrf.mxu0
  %v1248 = vadd.f32 0.0, %v1247
  %v1249 = vpop.f32.mrf.mxu0
  %v1250 = vadd.f32 0.0, %v1249
  %1251 = vdwg.mxu0
  %1252 = vmatprep.subr.bf16.mxu0 %v221
  %1253 = vmatpush1.bf16.msra.mxu0 %v220
  %1254 = vmatprep.subr.bf16.mxu0 %v217
  %1255 = vmatpush1.bf16.msra.mxu0 %v216
  %1256 = vmatprep.subr.bf16.mxu0 %v213
  %1257 = vmatpush1.bf16.msra.mxu0 %v212
  %1258 = vmatprep.subr.bf16.mxu0 %v209
  %1259 = vmatpush1.bf16.msra.mxu0 %v208
  %1260 = vmatprep.subr.bf16.mxu0 %v205
  %1261 = vmatpush1.bf16.msra.mxu0 %v204
  %1262 = vmatprep.subr.bf16.mxu0 %v201
  %1263 = vmatpush1.bf16.msra.mxu0 %v200
  %1264 = vmatprep.subr.bf16.mxu0 %v197
  %1265 = vmatpush1.bf16.msra.mxu0 %v196
  %1266 = vmatprep.subr.bf16.mxu0 %v193
  %1267 = vmatpush1.bf16.msra.mxu0 %v192
  %1268 = vmatprep.subr.bf16.mxu0 0
  %1269 = vmatpush2.bf16.msra.mxu0 0
  %1270 = vmatprep.subr.bf16.mxu0 0
  %1271 = vmatpush2.bf16.msra.mxu0 0
  %1272 = vmatprep.subr.bf16.mxu0 0
  %1273 = vmatpush2.bf16.msra.mxu0 0
  %1274 = vmatprep.subr.bf16.mxu0 0
  %1275 = vmatpush2.bf16.msra.mxu0 0
  %1276 = vmatprep.subr.bf16.mxu0 0
  %1277 = vmatpush2.bf16.msra.mxu0 0
  %1278 = vmatprep.subr.bf16.mxu0 0
  %1279 = vmatpush2.bf16.msra.mxu0 0
  %1280 = vmatprep.subr.bf16.mxu0 0
  %1281 = vmatpush2.bf16.msra.mxu0 0
  %1282 = vmatprep.subr.bf16.mxu0 0
  %1283 = vmatpush2.bf16.msra.mxu0 0
  %1284 = vmatprep.mubr.bf16.mxu0 0
  %1285 = vmatmul.mubr.bf16.gmra.mxu0 %v1156
  %v1286 = vpop.f32.mrf.mxu0
  %v1287 = vadd.f32 0.0, %v1286
  %v1288 = vpop.f32.mrf.mxu0
  %v1289 = vadd.f32 0.0, %v1288
  %v1290 = vpop.f32.mrf.mxu0
  %v1291 = vadd.f32 0.0, %v1290
  %v1292 = vpop.f32.mrf.mxu0
  %v1293 = vadd.f32 0.0, %v1292
  %1294 = vdwg.mxu0
  %v1295 = vadd.f32 %v26, %v1244
  %v1296 = vadd.f32 %v27, %v1246
  %v1297 = vadd.f32 %v28, %v1287
  %v1298 = vadd.f32 %v29, %v1289
  %v1299 = vadd.f32 %v30, %v1248
  %v1300 = vadd.f32 %v31, %v1250
  %v1301 = vadd.f32 %v32, %v1291
  %v1302 = vadd.f32 %v33, %v1293
  %v1303 = vmul.f32 %v1295, 0.5
  %v1304 = vmul.f32 %v1299, 0.5
  %v1305 = vtanh.pop %v1303
  %v1306 = vtanh.pop %v1304
  %v1307 = vmul.f32 %v1305, 0.5
  %v1308 = vmul.f32 %v1306, 0.5
  %v1309 = vadd.f32 %v1307, 0.5
  %v1310 = vadd.f32 %v1308, 0.5
  %v1311 = vmul.f32 %v1296, 0.5
  %v1312 = vmul.f32 %v1300, 0.5
  %v1313 = vtanh.pop %v1311
  %v1314 = vtanh.pop %v1312
  %v1315 = vmul.f32 %v1313, 0.5
  %v1316 = vmul.f32 %v1314, 0.5
  %v1317 = vadd.f32 %v1315, 0.5
  %v1318 = vadd.f32 %v1316, 0.5
  %v1319 = vtanh.pop %v1297
  %v1320 = vtanh.pop %v1301
  %v1321 = vmul.f32 %v1298, 0.5
  %v1322 = vmul.f32 %v1302, 0.5
  %v1323 = vtanh.pop %v1321
  %v1324 = vtanh.pop %v1322
  %v1325 = vmul.f32 %v1323, 0.5
  %v1326 = vmul.f32 %v1324, 0.5
  %v1327 = vadd.f32 %v1325, 0.5
  %v1328 = vadd.f32 %v1326, 0.5
  %v1329 = vmul.f32 %v1317, %v1150
  %v1330 = vmul.f32 %v1318, %v1151
  %v1331 = vmul.f32 %v1309, %v1319
  %v1332 = vmul.f32 %v1310, %v1320
  %v1333 = vadd.f32 %v1329, %v1331
  %v1334 = vadd.f32 %v1330, %v1332
  %v1335 = vtanh.pop %v1333
  %v1336 = vtanh.pop %v1334
  %v1337 = vmul.f32 %v1327, %v1335
  %v1338 = vmul.f32 %v1328, %v1336
  %v1339 = vpack.c.bf16 %v1338, %v1337
  %1340 = vmatprep.subr.bf16.mxu0 0
  %1341 = vmatpush1.bf16.msra.mxu0 %v424
  %1342 = vmatprep.subr.bf16.mxu0 0
  %1343 = vmatpush1.bf16.msra.mxu0 %v423
  %1344 = vmatprep.subr.bf16.mxu0 0
  %1345 = vmatpush1.bf16.msra.mxu0 %v422
  %1346 = vmatprep.subr.bf16.mxu0 0
  %1347 = vmatpush1.bf16.msra.mxu0 %v421
  %1348 = vmatprep.subr.bf16.mxu0 0
  %1349 = vmatpush1.bf16.msra.mxu0 %v420
  %1350 = vmatprep.subr.bf16.mxu0 0
  %1351 = vmatpush1.bf16.msra.mxu0 %v419
  %1352 = vmatprep.subr.bf16.mxu0 0
  %1353 = vmatpush1.bf16.msra.mxu0 %v418
  %1354 = vmatprep.subr.bf16.mxu0 0
  %1355 = vmatpush1.bf16.msra.mxu0 %v417
  %1356 = vmatprep.subr.bf16.mxu0 0
  %1357 = vmatpush2.bf16.msra.mxu0 0
  %1358 = vmatprep.subr.bf16.mxu0 0
  %1359 = vmatpush2.bf16.msra.mxu0 0
  %1360 = vmatprep.subr.bf16.mxu0 0
  %1361 = vmatpush2.bf16.msra.mxu0 0
  %1362 = vmatprep.subr.bf16.mxu0 0
  %1363 = vmatpush2.bf16.msra.mxu0 0
  %1364 = vmatprep.subr.bf16.mxu0 0
  %1365 = vmatpush2.bf16.msra.mxu0 0
  %1366 = vmatprep.subr.bf16.mxu0 0
  %1367 = vmatpush2.bf16.msra.mxu0 0
  %1368 = vmatprep.subr.bf16.mxu0 0
  %1369 = vmatpush2.bf16.msra.mxu0 0
  %1370 = vmatprep.subr.bf16.mxu0 0
  %1371 = vmatpush2.bf16.msra.mxu0 0
  %1372 = vmatprep.mubr.bf16.mxu0 0
  %1373 = vmatmul.mubr.bf16.gmra.mxu0 %v1339
  %v1374 = vpop.f32.mrf.mxu0
  %v1375 = vadd.f32 %v87, %v1374
  %v1376 = vpop.f32.mrf.mxu0
  %v1377 = vpop.f32.mrf.mxu0
  %v1378 = vadd.f32 %v87, %v1377
  %v1379 = vpop.f32.mrf.mxu0
  %1380 = vdwg.mxu0
  %1383 = vrot.lane.b32.xlu0 %v1375, 80
  %v1384 = vpop.permute.xlu0 %1383
  %1385 = vrot.lane.b32.xlu0 %v1378, 80
  %v1386 = vpop.permute.xlu0 %1385
  %vm1389 = vcmask 786048
  %1390 = vst.msk [vmem:[%s4] sm:$0xff] %vm1389, %v1384
  %1391 = vst.msk [vmem:[%s4 + $0x8] sm:$0xff] %vm1389, %v1386
  %1392 = vmatprep.subr.bf16.mxu0 %v219
  %1393 = vmatpush1.bf16.msra.mxu0 %v218
  %1394 = vmatprep.subr.bf16.mxu0 %v215
  %1395 = vmatpush1.bf16.msra.mxu0 %v214
  %1396 = vmatprep.subr.bf16.mxu0 %v211
  %1397 = vmatpush1.bf16.msra.mxu0 %v210
  %1398 = vmatprep.subr.bf16.mxu0 %v207
  %1399 = vmatpush1.bf16.msra.mxu0 %v206
  %1400 = vmatprep.subr.bf16.mxu0 %v203
  %1401 = vmatpush1.bf16.msra.mxu0 %v202
  %1402 = vmatprep.subr.bf16.mxu0 %v199
  %1403 = vmatpush1.bf16.msra.mxu0 %v198
  %1404 = vmatprep.subr.bf16.mxu0 %v195
  %1405 = vmatpush1.bf16.msra.mxu0 %v194
  %1406 = vmatprep.subr.bf16.mxu0 %v191
  %1407 = vmatpush1.bf16.msra.mxu0 %v190
  %1408 = vmatprep.subr.bf16.mxu0 0
  %1409 = vmatpush2.bf16.msra.mxu0 0
  %1410 = vmatprep.subr.bf16.mxu0 0
  %1411 = vmatpush2.bf16.msra.mxu0 0
  %1412 = vmatprep.subr.bf16.mxu0 0
  %1413 = vmatpush2.bf16.msra.mxu0 0
  %1414 = vmatprep.subr.bf16.mxu0 0
  %1415 = vmatpush2.bf16.msra.mxu0 0
  %1416 = vmatprep.subr.bf16.mxu0 0
  %1417 = vmatpush2.bf16.msra.mxu0 0
  %1418 = vmatprep.subr.bf16.mxu0 0
  %1419 = vmatpush2.bf16.msra.mxu0 0
  %1420 = vmatprep.subr.bf16.mxu0 0
  %1421 = vmatpush2.bf16.msra.mxu0 0
  %1422 = vmatprep.subr.bf16.mxu0 0
  %1423 = vmatpush2.bf16.msra.mxu0 0
  %1424 = vmatprep.mubr.bf16.mxu0 0
  %1425 = vmatmul.mubr.bf16.gmra.mxu0 %v1339
  %v1426 = vpop.f32.mrf.mxu0
  %v1427 = vadd.f32 0.0, %v1426
  %v1428 = vpop.f32.mrf.mxu0
  %v1429 = vadd.f32 0.0, %v1428
  %v1430 = vpop.f32.mrf.mxu0
  %v1431 = vadd.f32 0.0, %v1430
  %v1432 = vpop.f32.mrf.mxu0
  %v1433 = vadd.f32 0.0, %v1432
  %1434 = vdwg.mxu0
  %1435 = vmatprep.subr.bf16.mxu0 %v221
  %1436 = vmatpush1.bf16.msra.mxu0 %v220
  %1437 = vmatprep.subr.bf16.mxu0 %v217
  %1438 = vmatpush1.bf16.msra.mxu0 %v216
  %1439 = vmatprep.subr.bf16.mxu0 %v213
  %1440 = vmatpush1.bf16.msra.mxu0 %v212
  %1441 = vmatprep.subr.bf16.mxu0 %v209
  %1442 = vmatpush1.bf16.msra.mxu0 %v208
  %1443 = vmatprep.subr.bf16.mxu0 %v205
  %1444 = vmatpush1.bf16.msra.mxu0 %v204
  %1445 = vmatprep.subr.bf16.mxu0 %v201
  %1446 = vmatpush1.bf16.msra.mxu0 %v200
  %1447 = vmatprep.subr.bf16.mxu0 %v197
  %1448 = vmatpush1.bf16.msra.mxu0 %v196
  %1449 = vmatprep.subr.bf16.mxu0 %v193
  %1450 = vmatpush1.bf16.msra.mxu0 %v192
  %1451 = vmatprep.subr.bf16.mxu0 0
  %1452 = vmatpush2.bf16.msra.mxu0 0
  %1453 = vmatprep.subr.bf16.mxu0 0
  %1454 = vmatpush2.bf16.msra.mxu0 0
  %1455 = vmatprep.subr.bf16.mxu0 0
  %1456 = vmatpush2.bf16.msra.mxu0 0
  %1457 = vmatprep.subr.bf16.mxu0 0
  %1458 = vmatpush2.bf16.msra.mxu0 0
  %1459 = vmatprep.subr.bf16.mxu0 0
  %1460 = vmatpush2.bf16.msra.mxu0 0
  %1461 = vmatprep.subr.bf16.mxu0 0
  %1462 = vmatpush2.bf16.msra.mxu0 0
  %1463 = vmatprep.subr.bf16.mxu0 0
  %1464 = vmatpush2.bf16.msra.mxu0 0
  %1465 = vmatprep.subr.bf16.mxu0 0
  %1466 = vmatpush2.bf16.msra.mxu0 0
  %1467 = vmatprep.mubr.bf16.mxu0 0
  %1468 = vmatmul.mubr.bf16.gmra.mxu0 %v1339
  %v1469 = vpop.f32.mrf.mxu0
  %v1470 = vadd.f32 0.0, %v1469
  %v1471 = vpop.f32.mrf.mxu0
  %v1472 = vadd.f32 0.0, %v1471
  %v1473 = vpop.f32.mrf.mxu0
  %v1474 = vadd.f32 0.0, %v1473
  %v1475 = vpop.f32.mrf.mxu0
  %v1476 = vadd.f32 0.0, %v1475
  %1477 = vdwg.mxu0
  %v1478 = vadd.f32 %v26, %v1427
  %v1479 = vadd.f32 %v27, %v1429
  %v1480 = vadd.f32 %v28, %v1470
  %v1481 = vadd.f32 %v29, %v1472
  %v1482 = vadd.f32 %v30, %v1431
  %v1483 = vadd.f32 %v31, %v1433
  %v1484 = vadd.f32 %v32, %v1474
  %v1485 = vadd.f32 %v33, %v1476
  %v1486 = vmul.f32 %v1478, 0.5
  %v1487 = vmul.f32 %v1482, 0.5
  %v1488 = vtanh.pop %v1486
  %v1489 = vtanh.pop %v1487
  %v1490 = vmul.f32 %v1488, 0.5
  %v1491 = vmul.f32 %v1489, 0.5
  %v1492 = vadd.f32 %v1490, 0.5
  %v1493 = vadd.f32 %v1491, 0.5
  %v1494 = vmul.f32 %v1479, 0.5
  %v1495 = vmul.f32 %v1483, 0.5
  %v1496 = vtanh.pop %v1494
  %v1497 = vtanh.pop %v1495
  %v1498 = vmul.f32 %v1496, 0.5
  %v1499 = vmul.f32 %v1497, 0.5
  %v1500 = vadd.f32 %v1498, 0.5
  %v1501 = vadd.f32 %v1499, 0.5
  %v1502 = vtanh.pop %v1480
  %v1503 = vtanh.pop %v1484
  %v1504 = vmul.f32 %v1481, 0.5
  %v1505 = vmul.f32 %v1485, 0.5
  %v1506 = vtanh.pop %v1504
  %v1507 = vtanh.pop %v1505
  %v1508 = vmul.f32 %v1506, 0.5
  %v1509 = vmul.f32 %v1507, 0.5
  %v1510 = vadd.f32 %v1508, 0.5
  %v1511 = vadd.f32 %v1509, 0.5
  %v1512 = vmul.f32 %v1500, %v1333
  %v1513 = vmul.f32 %v1501, %v1334
  %v1514 = vmul.f32 %v1492, %v1502
  %v1515 = vmul.f32 %v1493, %v1503
  %v1516 = vadd.f32 %v1512, %v1514
  %v1517 = vadd.f32 %v1513, %v1515
  %v1518 = vtanh.pop %v1516
  %v1519 = vtanh.pop %v1517
  %v1520 = vmul.f32 %v1510, %v1518
  %v1521 = vmul.f32 %v1511, %v1519
  %v1522 = vpack.c.bf16 %v1521, %v1520
  %1523 = vmatprep.subr.bf16.mxu0 0
  %1524 = vmatpush1.bf16.msra.mxu0 %v424
  %1525 = vmatprep.subr.bf16.mxu0 0
  %1526 = vmatpush1.bf16.msra.mxu0 %v423
  %1527 = vmatprep.subr.bf16.mxu0 0
  %1528 = vmatpush1.bf16.msra.mxu0 %v422
  %1529 = vmatprep.subr.bf16.mxu0 0
  %1530 = vmatpush1.bf16.msra.mxu0 %v421
  %1531 = vmatprep.subr.bf16.mxu0 0
  %1532 = vmatpush1.bf16.msra.mxu0 %v420
  %1533 = vmatprep.subr.bf16.mxu0 0
  %1534 = vmatpush1.bf16.msra.mxu0 %v419
  %1535 = vmatprep.subr.bf16.mxu0 0
  %1536 = vmatpush1.bf16.msra.mxu0 %v418
  %1537 = vmatprep.subr.bf16.mxu0 0
  %1538 = vmatpush1.bf16.msra.mxu0 %v417
  %1539 = vmatprep.subr.bf16.mxu0 0
  %1540 = vmatpush2.bf16.msra.mxu0 0
  %1541 = vmatprep.subr.bf16.mxu0 0
  %1542 = vmatpush2.bf16.msra.mxu0 0
  %1543 = vmatprep.subr.bf16.mxu0 0
  %1544 = vmatpush2.bf16.msra.mxu0 0
  %1545 = vmatprep.subr.bf16.mxu0 0
  %1546 = vmatpush2.bf16.msra.mxu0 0
  %1547 = vmatprep.subr.bf16.mxu0 0
  %1548 = vmatpush2.bf16.msra.mxu0 0
  %1549 = vmatprep.subr.bf16.mxu0 0
  %1550 = vmatpush2.bf16.msra.mxu0 0
  %1551 = vmatprep.subr.bf16.mxu0 0
  %1552 = vmatpush2.bf16.msra.mxu0 0
  %1553 = vmatprep.subr.bf16.mxu0 0
  %1554 = vmatpush2.bf16.msra.mxu0 0
  %1555 = vmatprep.mubr.bf16.mxu0 0
  %1556 = vmatmul.mubr.bf16.gmra.mxu0 %v1522
  %v1557 = vpop.f32.mrf.mxu0
  %v1558 = vadd.f32 %v87, %v1557
  %v1559 = vpop.f32.mrf.mxu0
  %v1560 = vpop.f32.mrf.mxu0
  %v1561 = vadd.f32 %v87, %v1560
  %v1562 = vpop.f32.mrf.mxu0
  %1563 = vdwg.mxu0
  %1566 = vrot.lane.b32.xlu0 %v1558, 96
  %v1567 = vpop.permute.xlu0 %1566
  %1568 = vrot.lane.b32.xlu0 %v1561, 96
  %v1569 = vpop.permute.xlu0 %1568
  %vm1572 = vcmask 917248
  %1573 = vst.msk [vmem:[%s4] sm:$0xff] %vm1572, %v1567
  %1574 = vst.msk [vmem:[%s4 + $0x8] sm:$0xff] %vm1572, %v1569
  %1575 = vmatprep.subr.bf16.mxu0 %v219
  %1576 = vmatpush1.bf16.msra.mxu0 %v218
  %1577 = vmatprep.subr.bf16.mxu0 %v215
  %1578 = vmatpush1.bf16.msra.mxu0 %v214
  %1579 = vmatprep.subr.bf16.mxu0 %v211
  %1580 = vmatpush1.bf16.msra.mxu0 %v210
  %1581 = vmatprep.subr.bf16.mxu0 %v207
  %1582 = vmatpush1.bf16.msra.mxu0 %v206
  %1583 = vmatprep.subr.bf16.mxu0 %v203
  %1584 = vmatpush1.bf16.msra.mxu0 %v202
  %1585 = vmatprep.subr.bf16.mxu0 %v199
  %1586 = vmatpush1.bf16.msra.mxu0 %v198
  %1587 = vmatprep.subr.bf16.mxu0 %v195
  %1588 = vmatpush1.bf16.msra.mxu0 %v194
  %1589 = vmatprep.subr.bf16.mxu0 %v191
  %1590 = vmatpush1.bf16.msra.mxu0 %v190
  %1591 = vmatprep.subr.bf16.mxu0 0
  %1592 = vmatpush2.bf16.msra.mxu0 0
  %1593 = vmatprep.subr.bf16.mxu0 0
  %1594 = vmatpush2.bf16.msra.mxu0 0
  %1595 = vmatprep.subr.bf16.mxu0 0
  %1596 = vmatpush2.bf16.msra.mxu0 0
  %1597 = vmatprep.subr.bf16.mxu0 0
  %1598 = vmatpush2.bf16.msra.mxu0 0
  %1599 = vmatprep.subr.bf16.mxu0 0
  %1600 = vmatpush2.bf16.msra.mxu0 0
  %1601 = vmatprep.subr.bf16.mxu0 0
  %1602 = vmatpush2.bf16.msra.mxu0 0
  %1603 = vmatprep.subr.bf16.mxu0 0
  %1604 = vmatpush2.bf16.msra.mxu0 0
  %1605 = vmatprep.subr.bf16.mxu0 0
  %1606 = vmatpush2.bf16.msra.mxu0 0
  %1607 = vmatprep.mubr.bf16.mxu0 0
  %1608 = vmatmul.mubr.bf16.gmra.mxu0 %v1522
  %v1609 = vpop.f32.mrf.mxu0
  %v1610 = vadd.f32 0.0, %v1609
  %v1611 = vpop.f32.mrf.mxu0
  %v1612 = vadd.f32 0.0, %v1611
  %v1613 = vpop.f32.mrf.mxu0
  %v1614 = vadd.f32 0.0, %v1613
  %v1615 = vpop.f32.mrf.mxu0
  %v1616 = vadd.f32 0.0, %v1615
  %1617 = vdwg.mxu0
  %1618 = vmatprep.subr.bf16.mxu0 %v221
  %1619 = vmatpush1.bf16.msra.mxu0 %v220
  %1620 = vmatprep.subr.bf16.mxu0 %v217
  %1621 = vmatpush1.bf16.msra.mxu0 %v216
  %1622 = vmatprep.subr.bf16.mxu0 %v213
  %1623 = vmatpush1.bf16.msra.mxu0 %v212
  %1624 = vmatprep.subr.bf16.mxu0 %v209
  %1625 = vmatpush1.bf16.msra.mxu0 %v208
  %1626 = vmatprep.subr.bf16.mxu0 %v205
  %1627 = vmatpush1.bf16.msra.mxu0 %v204
  %1628 = vmatprep.subr.bf16.mxu0 %v201
  %1629 = vmatpush1.bf16.msra.mxu0 %v200
  %1630 = vmatprep.subr.bf16.mxu0 %v197
  %1631 = vmatpush1.bf16.msra.mxu0 %v196
  %1632 = vmatprep.subr.bf16.mxu0 %v193
  %1633 = vmatpush1.bf16.msra.mxu0 %v192
  %1634 = vmatprep.subr.bf16.mxu0 0
  %1635 = vmatpush2.bf16.msra.mxu0 0
  %1636 = vmatprep.subr.bf16.mxu0 0
  %1637 = vmatpush2.bf16.msra.mxu0 0
  %1638 = vmatprep.subr.bf16.mxu0 0
  %1639 = vmatpush2.bf16.msra.mxu0 0
  %1640 = vmatprep.subr.bf16.mxu0 0
  %1641 = vmatpush2.bf16.msra.mxu0 0
  %1642 = vmatprep.subr.bf16.mxu0 0
  %1643 = vmatpush2.bf16.msra.mxu0 0
  %1644 = vmatprep.subr.bf16.mxu0 0
  %1645 = vmatpush2.bf16.msra.mxu0 0
  %1646 = vmatprep.subr.bf16.mxu0 0
  %1647 = vmatpush2.bf16.msra.mxu0 0
  %1648 = vmatprep.subr.bf16.mxu0 0
  %1649 = vmatpush2.bf16.msra.mxu0 0
  %1650 = vmatprep.mubr.bf16.mxu0 0
  %1651 = vmatmul.mubr.bf16.gmra.mxu0 %v1522
  %v1652 = vpop.f32.mrf.mxu0
  %v1653 = vadd.f32 0.0, %v1652
  %v1654 = vpop.f32.mrf.mxu0
  %v1655 = vadd.f32 0.0, %v1654
  %v1656 = vpop.f32.mrf.mxu0
  %v1657 = vadd.f32 0.0, %v1656
  %v1658 = vpop.f32.mrf.mxu0
  %v1659 = vadd.f32 0.0, %v1658
  %1660 = vdwg.mxu0
  %v1661 = vadd.f32 %v26, %v1610
  %v1662 = vadd.f32 %v27, %v1612
  %v1663 = vadd.f32 %v28, %v1653
  %v1664 = vadd.f32 %v29, %v1655
  %v1665 = vadd.f32 %v30, %v1614
  %v1666 = vadd.f32 %v31, %v1616
  %v1667 = vadd.f32 %v32, %v1657
  %v1668 = vadd.f32 %v33, %v1659
  %v1669 = vmul.f32 %v1661, 0.5
  %v1670 = vmul.f32 %v1665, 0.5
  %v1671 = vtanh.pop %v1669
  %v1672 = vtanh.pop %v1670
  %v1673 = vmul.f32 %v1671, 0.5
  %v1674 = vmul.f32 %v1672, 0.5
  %v1675 = vadd.f32 %v1673, 0.5
  %v1676 = vadd.f32 %v1674, 0.5
  %v1677 = vmul.f32 %v1662, 0.5
  %v1678 = vmul.f32 %v1666, 0.5
  %v1679 = vtanh.pop %v1677
  %v1680 = vtanh.pop %v1678
  %v1681 = vmul.f32 %v1679, 0.5
  %v1682 = vmul.f32 %v1680, 0.5
  %v1683 = vadd.f32 %v1681, 0.5
  %v1684 = vadd.f32 %v1682, 0.5
  %v1685 = vtanh.pop %v1663
  %v1686 = vtanh.pop %v1667
  %v1687 = vmul.f32 %v1664, 0.5
  %v1688 = vmul.f32 %v1668, 0.5
  %v1689 = vtanh.pop %v1687
  %v1690 = vtanh.pop %v1688
  %v1691 = vmul.f32 %v1689, 0.5
  %v1692 = vmul.f32 %v1690, 0.5
  %v1693 = vadd.f32 %v1691, 0.5
  %v1694 = vadd.f32 %v1692, 0.5
  %v1695 = vmul.f32 %v1683, %v1516
  %v1696 = vmul.f32 %v1684, %v1517
  %v1697 = vmul.f32 %v1675, %v1685
  %v1698 = vmul.f32 %v1676, %v1686
  %v1699 = vadd.f32 %v1695, %v1697
  %v1700 = vadd.f32 %v1696, %v1698
  %v1701 = vtanh.pop %v1699
  %v1702 = vtanh.pop %v1700
  %v1703 = vmul.f32 %v1693, %v1701
  %v1704 = vmul.f32 %v1694, %v1702
  %v1705 = vpack.c.bf16 %v1704, %v1703
  %1706 = vmatprep.subr.bf16.mxu0 0
  %1707 = vmatpush1.bf16.msra.mxu0 %v424
  %1708 = vmatprep.subr.bf16.mxu0 0
  %1709 = vmatpush1.bf16.msra.mxu0 %v423
  %1710 = vmatprep.subr.bf16.mxu0 0
  %1711 = vmatpush1.bf16.msra.mxu0 %v422
  %1712 = vmatprep.subr.bf16.mxu0 0
  %1713 = vmatpush1.bf16.msra.mxu0 %v421
  %1714 = vmatprep.subr.bf16.mxu0 0
  %1715 = vmatpush1.bf16.msra.mxu0 %v420
  %1716 = vmatprep.subr.bf16.mxu0 0
  %1717 = vmatpush1.bf16.msra.mxu0 %v419
  %1718 = vmatprep.subr.bf16.mxu0 0
  %1719 = vmatpush1.bf16.msra.mxu0 %v418
  %1720 = vmatprep.subr.bf16.mxu0 0
  %1721 = vmatpush1.bf16.msra.mxu0 %v417
  %1722 = vmatprep.subr.bf16.mxu0 0
  %1723 = vmatpush2.bf16.msra.mxu0 0
  %1724 = vmatprep.subr.bf16.mxu0 0
  %1725 = vmatpush2.bf16.msra.mxu0 0
  %1726 = vmatprep.subr.bf16.mxu0 0
  %1727 = vmatpush2.bf16.msra.mxu0 0
  %1728 = vmatprep.subr.bf16.mxu0 0
  %1729 = vmatpush2.bf16.msra.mxu0 0
  %1730 = vmatprep.subr.bf16.mxu0 0
  %1731 = vmatpush2.bf16.msra.mxu0 0
  %1732 = vmatprep.subr.bf16.mxu0 0
  %1733 = vmatpush2.bf16.msra.mxu0 0
  %1734 = vmatprep.subr.bf16.mxu0 0
  %1735 = vmatpush2.bf16.msra.mxu0 0
  %1736 = vmatprep.subr.bf16.mxu0 0
  %1737 = vmatpush2.bf16.msra.mxu0 0
  %1738 = vmatprep.mubr.bf16.mxu0 0
  %1739 = vmatmul.mubr.bf16.gmra.mxu0 %v1705
  %v1740 = vpop.f32.mrf.mxu0
  %v1741 = vadd.f32 %v87, %v1740
  %v1742 = vpop.f32.mrf.mxu0
  %v1743 = vpop.f32.mrf.mxu0
  %v1744 = vadd.f32 %v87, %v1743
  %v1745 = vpop.f32.mrf.mxu0
  %1746 = vdwg.mxu0
  %1749 = vrot.lane.b32.xlu0 %v1741, 112
  %v1750 = vpop.permute.xlu0 %1749
  %1751 = vrot.lane.b32.xlu0 %v1744, 112
  %v1752 = vpop.permute.xlu0 %1751
  %vm1755 = vcmask 1048448
  %1756 = vst.msk [vmem:[%s4] sm:$0xff] %vm1755, %v1750
  %1757 = vst.msk [vmem:[%s4 + $0x8] sm:$0xff] %vm1755, %v1752
  %1758 = vst [vmem:[#allocation2] sm:$0xff] %v1703
  %1759 = vst [vmem:[#allocation2 + $0x8] sm:$0xff] %v1704
  %1760 = vst [vmem:[#allocation3] sm:$0xff] %v1699
  %1761 = vst [vmem:[#allocation3 + $0x8] sm:$0xff] %v1700
  // Predicated region
  $region22: #{bilstm_decoder_forward.1} parent=0 // pred_check
    _
  $region23: #{bilstm_decoder_forward.1} parent=0 // pred_check_branch
    %1763 = sbr.rel (0) target = $region25
  $region24: #{bilstm_decoder_forward.1} parent=0 // pred_region
    _
  $region25: #{bilstm_decoder_forward.1} parent=0 // pred_fallthru
    _
  // Predicated region
  $region26: #{bilstm_decoder_forward.1} parent=0 // pred_check
    _
  $region27: #{bilstm_decoder_forward.1} parent=0 // pred_check_branch
    %1765 = sbr.rel (0) target = $region29
  $region28: #{bilstm_decoder_forward.1} parent=0 // pred_region
    _
  $region29: #{bilstm_decoder_forward.1} parent=0 // pred_fallthru
    _

</llo_original>
